<compile_context>
chip_gen: v5e
topology: v5e:2x2
jax: 0.10.0
libtpu: 0.0.40
codegen_flags: <defaults>
</compile_context>

<pallas_src>
import functools

import jax
import jax.numpy as jnp
from jax.experimental import pallas as pl
from jax.experimental.pallas import tpu as pltpu

IN_DIM = 28 * 28  # 784
ENC_DIMS = [IN_DIM, 128, 64, 12, 3]
DEC_DIMS = [3, 12, 64, 128, IN_DIM]
TM_MAX = 1024  # max batch tile (multiple of 16)


def _round_up(n, m):
    return ((n + m - 1) // m) * m


def _bf16_activations_supported():
    # v6e / v7x have a bf16 EUP/VPU -> run the tanh/sigmoid chain in bf16 there.
    # v5e and older lack bf16 EUP: bf16 activations would only add converts, so
    # keep activation math in f32 on those chips.
    try:
        kind = jax.devices()[0].device_kind.lower()
    except Exception:
        return False
    return not any(old in kind for old in ("v2", "v3", "v4", "v5"))


_BF16_ACT = _bf16_activations_supported()


def _autoencoder_kernel(x_ref,
                        w1, b1, w2, b2, w3, b3, w4, b4,
                        w5, b5, w6, b6, w7, b7, w8, b8,
                        enc_ref, dec_ref, *, act_dtype):
    # Weights arrive pre-cast to bf16; the x block is already bf16. Matmuls are
    # single-pass bf16 MXU with f32 accumulation; the bias add stays in f32.
    def dense(h, w_ref, b_ref):
        return jnp.dot(h.astype(jnp.bfloat16), w_ref[...],
                       preferred_element_type=jnp.float32) + b_ref[...]

    def tanh(y):
        # act_dtype == bf16 on v6e/v7x (bf16 EUP), f32 on v5e.
        return jnp.tanh(y.astype(act_dtype))

    x = x_ref[...]

    # ---- encoder ----
    h = tanh(dense(x, w1, b1))
    h = tanh(dense(h, w2, b2))
    h = tanh(dense(h, w3, b3))
    enc = dense(h, w4, b4)                       # f32 latent, no activation
    enc_ref[...] = enc.astype(enc_ref.dtype)

    # ---- decoder ----
    d = tanh(dense(enc, w5, b5))
    d = tanh(dense(d, w6, b6))
    d = tanh(dense(d, w7, b7))
    d = dense(d, w8, b8).astype(act_dtype)
    # sigmoid(x) == 0.5 * tanh(0.5 * x) + 0.5 : a single EUP op per element on
    # the wide (TM, 784) decoder output instead of exp + reciprocal.
    dec_ref[...] = (0.5 * jnp.tanh(0.5 * d) + 0.5).astype(dec_ref.dtype)


def init_params(key):
    """Deterministic PyTorch-style uniform(-1/sqrt(fan_in), 1/sqrt(fan_in)) init.

    Weights are created directly in (in_features, out_features) layout.
    Biases are kept as (1, out_features) so they broadcast cleanly in-kernel.
    """
    params = []
    dims = list(zip(ENC_DIMS[:-1], ENC_DIMS[1:])) + list(zip(DEC_DIMS[:-1], DEC_DIMS[1:]))
    for (fan_in, fan_out) in dims:
        key, kw, kb = jax.random.split(key, 3)
        bound = 1.0 / jnp.sqrt(float(fan_in))
        w = jax.random.uniform(kw, (fan_in, fan_out), jnp.float32, -bound, bound)
        b = jax.random.uniform(kb, (1, fan_out), jnp.float32, -bound, bound)
        params.append((w, b))
    return params


def prepare_params(params):
    """Pre-cast weights to bf16 once on the host side (halves weight DMA + VMEM
    residency and removes the per-step in-kernel cast). Biases stay f32."""
    return [(w.astype(jnp.bfloat16), b) for (w, b) in params]


@jax.jit
def autoencoder_forward(x, params):
    """x: (B, 784). Returns (encoded (B, 3) f32, decoded (B, 784) bf16).

    `params` should come from prepare_params() (bf16 weights, f32 biases).
    """
    B, D = x.shape
    assert D == IN_DIM

    # Stream x in bf16: the MXU consumes it in bf16 anyway and it halves the
    # dominant input DMA. Cast once here if the caller passed f32.
    x = x.astype(jnp.bfloat16)

    # Batch tile: multiple of 16 (bf16 sublane packing), capped at TM_MAX.
    # No wrapper-side padding -- Pallas masks the ragged last block (compute is
    # row-independent, so garbage OOB rows never leak into valid rows and are
    # discarded on writeback).
    if B <= TM_MAX:
        TM = _round_up(B, 16)
    else:
        # Keep >= 2 grid steps so the "parallel" batch axis can be split across
        # the two TensorCores on v7x-class chips.
        TM = min(TM_MAX, _round_up(pl.cdiv(B, 2), 16))
    grid = (pl.cdiv(B, TM),)

    x_spec = pl.BlockSpec((TM, IN_DIM), lambda i: (i, 0))
    enc_spec = pl.BlockSpec((TM, ENC_DIMS[-1]), lambda i: (i, 0))
    dec_spec = pl.BlockSpec((TM, IN_DIM), lambda i: (i, 0))

    def full_spec(arr):
        # Constant block index across the grid -> block DMA'd into VMEM once,
        # then kept resident for every grid step (no re-fetch).
        return pl.BlockSpec(arr.shape, lambda i: (0, 0))

    flat_params = [t for wb in params for t in wb]
    in_specs = [x_spec] + [full_spec(p) for p in flat_params]

    kernel = functools.partial(
        _autoencoder_kernel,
        act_dtype=jnp.bfloat16 if _BF16_ACT else jnp.float32)

    enc, dec = pl.pallas_call(
        kernel,
        out_shape=(
            jax.ShapeDtypeStruct((B, ENC_DIMS[-1]), jnp.float32),
            # bf16 decoder output halves the dominant HBM write stream; the
            # sigmoid output in [0,1] fits bf16 well inside the 2e-2 tolerance.
            jax.ShapeDtypeStruct((B, IN_DIM), jnp.bfloat16),
        ),
        grid=grid,
        in_specs=in_specs,
        out_specs=(enc_spec, dec_spec),
        compiler_params=pltpu.CompilerParams(
            dimension_semantics=("parallel",),
            # Peak VMEM at TM=1024 with bf16 I/O: ~3.1 MiB double-buffered x +
            # ~3.1 MiB double-buffered bf16 dec + ~1 MiB lane-padded enc blocks
            # + ~1.2 MiB resident bf16 weights (x2 buffers) + a few MiB of f32
            # intermediates  ->  ~12-15 MiB. 48 MiB leaves headroom on every
            # generation (v7x physical VMEM = 64 MiB/TC).
            vmem_limit_bytes=48 * 1024 * 1024),
    )(x, *flat_params)

    return enc, dec


def _reference_forward(x, params):
    h = x
    # encoder: tanh on first 3 layers, last is linear-only
    for i in range(4):
        w, b = params[i]
        h = h @ w + b
        if i < 3:
            h = jnp.tanh(h)
    enc = h
    d = enc
    for i in range(4, 8):
        w, b = params[i]
        d = d @ w + b
        if i < 7:
            d = jnp.tanh(d)
    dec = jax.nn.sigmoid(d)
    return enc, dec


if __name__ == "__main__":
    key = jax.random.PRNGKey(0)
    kx, kp = jax.random.split(key)

    # Small batch of flattened 28x28 images; deliberately not a multiple of the
    # tile granularity to exercise the no-pad ragged-last-block path.
    B = 12
    x = jax.random.normal(kx, (B, IN_DIM), jnp.float32)
    params_f32 = init_params(kp)
    params = prepare_params(params_f32)  # bf16 weights, f32 biases

    enc, dec = autoencoder_forward(x, params)
    jax.block_until_ready((enc, dec))

    # sanity check against a pure-JAX f32 reference (bf16 MXU matmuls, bf16
    # activations on v6e/v7x, bf16 decoder output -> loosened tolerances)
    enc_ref, dec_ref = _reference_forward(x, params_f32)
    assert enc.shape == (B, ENC_DIMS[-1]) and dec.shape == (B, IN_DIM)
    assert jnp.allclose(enc, enc_ref, atol=5e-2, rtol=5e-2)
    assert jnp.allclose(dec.astype(jnp.float32), dec_ref, atol=2e-2, rtol=2e-2)

    print("KERNEL_OK")
</pallas_src>

<mosaic_0001>
module attributes {stable_mosaic.version = 11 : i64} {
  func.func @_autoencoder_kernel(%arg0: i32, %arg1: memref<16x784xbf16, #tpu.memory_space<vmem>>, %arg2: memref<784x128xbf16, #tpu.memory_space<vmem>>, %arg3: memref<1x128xf32, #tpu.memory_space<vmem>>, %arg4: memref<128x64xbf16, #tpu.memory_space<vmem>>, %arg5: memref<1x64xf32, #tpu.memory_space<vmem>>, %arg6: memref<64x12xbf16, #tpu.memory_space<vmem>>, %arg7: memref<1x12xf32, #tpu.memory_space<vmem>>, %arg8: memref<12x3xbf16, #tpu.memory_space<vmem>>, %arg9: memref<1x3xf32, #tpu.memory_space<vmem>>, %arg10: memref<3x12xbf16, #tpu.memory_space<vmem>>, %arg11: memref<1x12xf32, #tpu.memory_space<vmem>>, %arg12: memref<12x64xbf16, #tpu.memory_space<vmem>>, %arg13: memref<1x64xf32, #tpu.memory_space<vmem>>, %arg14: memref<64x128xbf16, #tpu.memory_space<vmem>>, %arg15: memref<1x128xf32, #tpu.memory_space<vmem>>, %arg16: memref<128x784xbf16, #tpu.memory_space<vmem>>, %arg17: memref<1x784xf32, #tpu.memory_space<vmem>>, %arg18: memref<16x3xf32, #tpu.memory_space<vmem>>, %arg19: memref<16x784xbf16, #tpu.memory_space<vmem>>) attributes {dimension_semantics = [#tpu.dimension_semantics<parallel>], iteration_bounds = array<i64: 1>, scalar_prefetch = 0 : i64, scratch_operands = 0 : i64, tpu.core_type = #tpu.core_type<tc>, window_params = [{transform_indices = @transform_0, window_bounds = array<i64: 16, 784>}, {pipeline_mode = #tpu.pipeline_mode<synchronous>, transform_indices = @transform_1, window_bounds = array<i64: 784, 128>}, {pipeline_mode = #tpu.pipeline_mode<synchronous>, transform_indices = @transform_2, window_bounds = array<i64: 1, 128>}, {pipeline_mode = #tpu.pipeline_mode<synchronous>, transform_indices = @transform_3, window_bounds = array<i64: 128, 64>}, {pipeline_mode = #tpu.pipeline_mode<synchronous>, transform_indices = @transform_4, window_bounds = array<i64: 1, 64>}, {pipeline_mode = #tpu.pipeline_mode<synchronous>, transform_indices = @transform_5, window_bounds = array<i64: 64, 12>}, {pipeline_mode = #tpu.pipeline_mode<synchronous>, transform_indices = @transform_6, window_bounds = array<i64: 1, 12>}, {pipeline_mode = #tpu.pipeline_mode<synchronous>, transform_indices = @transform_7, window_bounds = array<i64: 12, 3>}, {pipeline_mode = #tpu.pipeline_mode<synchronous>, transform_indices = @transform_8, window_bounds = array<i64: 1, 3>}, {pipeline_mode = #tpu.pipeline_mode<synchronous>, transform_indices = @transform_9, window_bounds = array<i64: 3, 12>}, {pipeline_mode = #tpu.pipeline_mode<synchronous>, transform_indices = @transform_10, window_bounds = array<i64: 1, 12>}, {pipeline_mode = #tpu.pipeline_mode<synchronous>, transform_indices = @transform_11, window_bounds = array<i64: 12, 64>}, {pipeline_mode = #tpu.pipeline_mode<synchronous>, transform_indices = @transform_12, window_bounds = array<i64: 1, 64>}, {pipeline_mode = #tpu.pipeline_mode<synchronous>, transform_indices = @transform_13, window_bounds = array<i64: 64, 128>}, {pipeline_mode = #tpu.pipeline_mode<synchronous>, transform_indices = @transform_14, window_bounds = array<i64: 1, 128>}, {pipeline_mode = #tpu.pipeline_mode<synchronous>, transform_indices = @transform_15, window_bounds = array<i64: 128, 784>}, {pipeline_mode = #tpu.pipeline_mode<synchronous>, transform_indices = @transform_16, window_bounds = array<i64: 1, 784>}, {transform_indices = @transform_17, window_bounds = array<i64: 16, 3>}, {transform_indices = @transform_18, window_bounds = array<i64: 16, 784>}]} {
    %c0 = arith.constant 0 : index
    %c0_0 = arith.constant 0 : index
    %0 = vector.load %arg1[%c0, %c0_0] : memref<16x784xbf16, #tpu.memory_space<vmem>>, vector<16x784xbf16>
    %c0_1 = arith.constant 0 : index
    %c0_2 = arith.constant 0 : index
    %1 = vector.load %arg2[%c0_1, %c0_2] : memref<784x128xbf16, #tpu.memory_space<vmem>>, vector<784x128xbf16>
    %cst = arith.constant dense<0.000000e+00> : vector<16x128xf32>
    %2 = tpu.matmul %0, %1, %cst {dimension_numbers = #tpu.dot_dimension_numbers<[1], [0], [0], [1], [0, 0, 1, 1], [], []>} : vector<16x784xbf16>, vector<784x128xbf16>, vector<16x128xf32> -> vector<16x128xf32>
    %c0_3 = arith.constant 0 : index
    %c0_4 = arith.constant 0 : index
    %3 = vector.load %arg3[%c0_3, %c0_4] : memref<1x128xf32, #tpu.memory_space<vmem>>, vector<1x128xf32>
    %4 = vector.broadcast %3 : vector<1x128xf32> to vector<16x128xf32>
    %5 = arith.addf %2, %4 : vector<16x128xf32>
    %6 = arith.truncf %5 : vector<16x128xf32> to vector<16x128xbf16>
    %7 = math.tanh %6 : vector<16x128xbf16>
    %c0_5 = arith.constant 0 : index
    %c0_6 = arith.constant 0 : index
    %8 = vector.load %arg4[%c0_5, %c0_6] : memref<128x64xbf16, #tpu.memory_space<vmem>>, vector<128x64xbf16>
    %cst_7 = arith.constant dense<0.000000e+00> : vector<16x64xf32>
    %9 = tpu.matmul %7, %8, %cst_7 {dimension_numbers = #tpu.dot_dimension_numbers<[1], [0], [0], [1], [0, 0, 1, 1], [], []>} : vector<16x128xbf16>, vector<128x64xbf16>, vector<16x64xf32> -> vector<16x64xf32>
    %c0_8 = arith.constant 0 : index
    %c0_9 = arith.constant 0 : index
    %10 = vector.load %arg5[%c0_8, %c0_9] : memref<1x64xf32, #tpu.memory_space<vmem>>, vector<1x64xf32>
    %11 = vector.broadcast %10 : vector<1x64xf32> to vector<16x64xf32>
    %12 = arith.addf %9, %11 : vector<16x64xf32>
    %13 = arith.truncf %12 : vector<16x64xf32> to vector<16x64xbf16>
    %14 = math.tanh %13 : vector<16x64xbf16>
    %c0_10 = arith.constant 0 : index
    %c0_11 = arith.constant 0 : index
    %15 = vector.load %arg6[%c0_10, %c0_11] : memref<64x12xbf16, #tpu.memory_space<vmem>>, vector<64x12xbf16>
    %cst_12 = arith.constant dense<0.000000e+00> : vector<16x12xf32>
    %16 = tpu.matmul %14, %15, %cst_12 {dimension_numbers = #tpu.dot_dimension_numbers<[1], [0], [0], [1], [0, 0, 1, 1], [], []>} : vector<16x64xbf16>, vector<64x12xbf16>, vector<16x12xf32> -> vector<16x12xf32>
    %c0_13 = arith.constant 0 : index
    %c0_14 = arith.constant 0 : index
    %17 = vector.load %arg7[%c0_13, %c0_14] : memref<1x12xf32, #tpu.memory_space<vmem>>, vector<1x12xf32>
    %18 = vector.broadcast %17 : vector<1x12xf32> to vector<16x12xf32>
    %19 = arith.addf %16, %18 : vector<16x12xf32>
    %20 = arith.truncf %19 : vector<16x12xf32> to vector<16x12xbf16>
    %21 = math.tanh %20 : vector<16x12xbf16>
    %c0_15 = arith.constant 0 : index
    %c0_16 = arith.constant 0 : index
    %22 = vector.load %arg8[%c0_15, %c0_16] : memref<12x3xbf16, #tpu.memory_space<vmem>>, vector<12x3xbf16>
    %cst_17 = arith.constant dense<0.000000e+00> : vector<16x3xf32>
    %23 = tpu.matmul %21, %22, %cst_17 {dimension_numbers = #tpu.dot_dimension_numbers<[1], [0], [0], [1], [0, 0, 1, 1], [], []>} : vector<16x12xbf16>, vector<12x3xbf16>, vector<16x3xf32> -> vector<16x3xf32>
    %c0_18 = arith.constant 0 : index
    %c0_19 = arith.constant 0 : index
    %24 = vector.load %arg9[%c0_18, %c0_19] : memref<1x3xf32, #tpu.memory_space<vmem>>, vector<1x3xf32>
    %25 = vector.broadcast %24 : vector<1x3xf32> to vector<16x3xf32>
    %26 = arith.addf %23, %25 : vector<16x3xf32>
    %c0_20 = arith.constant 0 : index
    %c0_21 = arith.constant 0 : index
    %27 = vector.load %arg18[%c0_20, %c0_21] : memref<16x3xf32, #tpu.memory_space<vmem>>, vector<16x3xf32>
    tpu.vector_store %arg18[%c0_20, %c0_21], %26 {strides = array<i32>} : memref<16x3xf32, #tpu.memory_space<vmem>>, vector<16x3xf32>,
    %28 = arith.truncf %26 : vector<16x3xf32> to vector<16x3xbf16>
    %c0_22 = arith.constant 0 : index
    %c0_23 = arith.constant 0 : index
    %29 = vector.load %arg10[%c0_22, %c0_23] : memref<3x12xbf16, #tpu.memory_space<vmem>>, vector<3x12xbf16>
    %cst_24 = arith.constant dense<0.000000e+00> : vector<16x12xf32>
    %30 = tpu.matmul %28, %29, %cst_24 {dimension_numbers = #tpu.dot_dimension_numbers<[1], [0], [0], [1], [0, 0, 1, 1], [], []>} : vector<16x3xbf16>, vector<3x12xbf16>, vector<16x12xf32> -> vector<16x12xf32>
    %c0_25 = arith.constant 0 : index
    %c0_26 = arith.constant 0 : index
    %31 = vector.load %arg11[%c0_25, %c0_26] : memref<1x12xf32, #tpu.memory_space<vmem>>, vector<1x12xf32>
    %32 = vector.broadcast %31 : vector<1x12xf32> to vector<16x12xf32>
    %33 = arith.addf %30, %32 : vector<16x12xf32>
    %34 = arith.truncf %33 : vector<16x12xf32> to vector<16x12xbf16>
    %35 = math.tanh %34 : vector<16x12xbf16>
    %c0_27 = arith.constant 0 : index
    %c0_28 = arith.constant 0 : index
    %36 = vector.load %arg12[%c0_27, %c0_28] : memref<12x64xbf16, #tpu.memory_space<vmem>>, vector<12x64xbf16>
    %cst_29 = arith.constant dense<0.000000e+00> : vector<16x64xf32>
    %37 = tpu.matmul %35, %36, %cst_29 {dimension_numbers = #tpu.dot_dimension_numbers<[1], [0], [0], [1], [0, 0, 1, 1], [], []>} : vector<16x12xbf16>, vector<12x64xbf16>, vector<16x64xf32> -> vector<16x64xf32>
    %c0_30 = arith.constant 0 : index
    %c0_31 = arith.constant 0 : index
    %38 = vector.load %arg13[%c0_30, %c0_31] : memref<1x64xf32, #tpu.memory_space<vmem>>, vector<1x64xf32>
    %39 = vector.broadcast %38 : vector<1x64xf32> to vector<16x64xf32>
    %40 = arith.addf %37, %39 : vector<16x64xf32>
    %41 = arith.truncf %40 : vector<16x64xf32> to vector<16x64xbf16>
    %42 = math.tanh %41 : vector<16x64xbf16>
    %c0_32 = arith.constant 0 : index
    %c0_33 = arith.constant 0 : index
    %43 = vector.load %arg14[%c0_32, %c0_33] : memref<64x128xbf16, #tpu.memory_space<vmem>>, vector<64x128xbf16>
    %cst_34 = arith.constant dense<0.000000e+00> : vector<16x128xf32>
    %44 = tpu.matmul %42, %43, %cst_34 {dimension_numbers = #tpu.dot_dimension_numbers<[1], [0], [0], [1], [0, 0, 1, 1], [], []>} : vector<16x64xbf16>, vector<64x128xbf16>, vector<16x128xf32> -> vector<16x128xf32>
    %c0_35 = arith.constant 0 : index
    %c0_36 = arith.constant 0 : index
    %45 = vector.load %arg15[%c0_35, %c0_36] : memref<1x128xf32, #tpu.memory_space<vmem>>, vector<1x128xf32>
    %46 = vector.broadcast %45 : vector<1x128xf32> to vector<16x128xf32>
    %47 = arith.addf %44, %46 : vector<16x128xf32>
    %48 = arith.truncf %47 : vector<16x128xf32> to vector<16x128xbf16>
    %49 = math.tanh %48 : vector<16x128xbf16>
    %c0_37 = arith.constant 0 : index
    %c0_38 = arith.constant 0 : index
    %50 = vector.load %arg16[%c0_37, %c0_38] : memref<128x784xbf16, #tpu.memory_space<vmem>>, vector<128x784xbf16>
    %cst_39 = arith.constant dense<0.000000e+00> : vector<16x784xf32>
    %51 = tpu.matmul %49, %50, %cst_39 {dimension_numbers = #tpu.dot_dimension_numbers<[1], [0], [0], [1], [0, 0, 1, 1], [], []>} : vector<16x128xbf16>, vector<128x784xbf16>, vector<16x784xf32> -> vector<16x784xf32>
    %c0_40 = arith.constant 0 : index
    %c0_41 = arith.constant 0 : index
    %52 = vector.load %arg17[%c0_40, %c0_41] : memref<1x784xf32, #tpu.memory_space<vmem>>, vector<1x784xf32>
    %53 = vector.broadcast %52 : vector<1x784xf32> to vector<16x784xf32>
    %54 = arith.addf %51, %53 : vector<16x784xf32>
    %55 = arith.truncf %54 : vector<16x784xf32> to vector<16x784xbf16>
    %cst_42 = arith.constant 5.000000e-01 : bf16
    %56 = vector.broadcast %cst_42 : bf16 to vector<16x784xbf16>
    %57 = arith.mulf %56, %55 : vector<16x784xbf16>
    %58 = math.tanh %57 : vector<16x784xbf16>
    %cst_43 = arith.constant 5.000000e-01 : bf16
    %59 = vector.broadcast %cst_43 : bf16 to vector<16x784xbf16>
    %60 = arith.mulf %59, %58 : vector<16x784xbf16>
    %cst_44 = arith.constant 5.000000e-01 : bf16
    %61 = vector.broadcast %cst_44 : bf16 to vector<16x784xbf16>
    %62 = arith.addf %60, %61 : vector<16x784xbf16>
    %c0_45 = arith.constant 0 : index
    %c0_46 = arith.constant 0 : index
    %63 = vector.load %arg19[%c0_45, %c0_46] : memref<16x784xbf16, #tpu.memory_space<vmem>>, vector<16x784xbf16>
    tpu.vector_store %arg19[%c0_45, %c0_46], %62 {strides = array<i32>} : memref<16x784xbf16, #tpu.memory_space<vmem>>, vector<16x784xbf16>,
    return
  }
  func.func @transform_0(%arg0: i32) -> (i32, i32) {
    %c0_i32 = arith.constant 0 : i32
    %c0_i32_0 = arith.constant 0 : i32
    return %arg0, %c0_i32 : i32, i32
  }
  func.func @transform_1(%arg0: i32) -> (i32, i32) {
    %c0_i32 = arith.constant 0 : i32
    %c0_i32_0 = arith.constant 0 : i32
    %c0_i32_1 = arith.constant 0 : i32
    return %c0_i32, %c0_i32_0 : i32, i32
  }
  func.func @transform_2(%arg0: i32) -> (i32, i32) {
    %c0_i32 = arith.constant 0 : i32
    %c0_i32_0 = arith.constant 0 : i32
    %c0_i32_1 = arith.constant 0 : i32
    return %c0_i32, %c0_i32_0 : i32, i32
  }
  func.func @transform_3(%arg0: i32) -> (i32, i32) {
    %c0_i32 = arith.constant 0 : i32
    %c0_i32_0 = arith.constant 0 : i32
    %c0_i32_1 = arith.constant 0 : i32
    return %c0_i32, %c0_i32_0 : i32, i32
  }
  func.func @transform_4(%arg0: i32) -> (i32, i32) {
    %c0_i32 = arith.constant 0 : i32
    %c0_i32_0 = arith.constant 0 : i32
    %c0_i32_1 = arith.constant 0 : i32
    return %c0_i32, %c0_i32_0 : i32, i32
  }
  func.func @transform_5(%arg0: i32) -> (i32, i32) {
    %c0_i32 = arith.constant 0 : i32
    %c0_i32_0 = arith.constant 0 : i32
    %c0_i32_1 = arith.constant 0 : i32
    return %c0_i32, %c0_i32_0 : i32, i32
  }
  func.func @transform_6(%arg0: i32) -> (i32, i32) {
    %c0_i32 = arith.constant 0 : i32
    %c0_i32_0 = arith.constant 0 : i32
    %c0_i32_1 = arith.constant 0 : i32
    return %c0_i32, %c0_i32_0 : i32, i32
  }
  func.func @transform_7(%arg0: i32) -> (i32, i32) {
    %c0_i32 = arith.constant 0 : i32
    %c0_i32_0 = arith.constant 0 : i32
    %c0_i32_1 = arith.constant 0 : i32
    return %c0_i32, %c0_i32_0 : i32, i32
  }
  func.func @transform_8(%arg0: i32) -> (i32, i32) {
    %c0_i32 = arith.constant 0 : i32
    %c0_i32_0 = arith.constant 0 : i32
    %c0_i32_1 = arith.constant 0 : i32
    return %c0_i32, %c0_i32_0 : i32, i32
  }
  func.func @transform_9(%arg0: i32) -> (i32, i32) {
    %c0_i32 = arith.constant 0 : i32
    %c0_i32_0 = arith.constant 0 : i32
    %c0_i32_1 = arith.constant 0 : i32
    return %c0_i32, %c0_i32_0 : i32, i32
  }
  func.func @transform_10(%arg0: i32) -> (i32, i32) {
    %c0_i32 = arith.constant 0 : i32
    %c0_i32_0 = arith.constant 0 : i32
    %c0_i32_1 = arith.constant 0 : i32
    return %c0_i32, %c0_i32_0 : i32, i32
  }
  func.func @transform_11(%arg0: i32) -> (i32, i32) {
    %c0_i32 = arith.constant 0 : i32
    %c0_i32_0 = arith.constant 0 : i32
    %c0_i32_1 = arith.constant 0 : i32
    return %c0_i32, %c0_i32_0 : i32, i32
  }
  func.func @transform_12(%arg0: i32) -> (i32, i32) {
    %c0_i32 = arith.constant 0 : i32
    %c0_i32_0 = arith.constant 0 : i32
    %c0_i32_1 = arith.constant 0 : i32
    return %c0_i32, %c0_i32_0 : i32, i32
  }
  func.func @transform_13(%arg0: i32) -> (i32, i32) {
    %c0_i32 = arith.constant 0 : i32
    %c0_i32_0 = arith.constant 0 : i32
    %c0_i32_1 = arith.constant 0 : i32
    return %c0_i32, %c0_i32_0 : i32, i32
  }
  func.func @transform_14(%arg0: i32) -> (i32, i32) {
    %c0_i32 = arith.constant 0 : i32
    %c0_i32_0 = arith.constant 0 : i32
    %c0_i32_1 = arith.constant 0 : i32
    return %c0_i32, %c0_i32_0 : i32, i32
  }
  func.func @transform_15(%arg0: i32) -> (i32, i32) {
    %c0_i32 = arith.constant 0 : i32
    %c0_i32_0 = arith.constant 0 : i32
    %c0_i32_1 = arith.constant 0 : i32
    return %c0_i32, %c0_i32_0 : i32, i32
  }
  func.func @transform_16(%arg0: i32) -> (i32, i32) {
    %c0_i32 = arith.constant 0 : i32
    %c0_i32_0 = arith.constant 0 : i32
    %c0_i32_1 = arith.constant 0 : i32
    return %c0_i32, %c0_i32_0 : i32, i32
  }
  func.func @transform_17(%arg0: i32) -> (i32, i32) {
    %c0_i32 = arith.constant 0 : i32
    %c0_i32_0 = arith.constant 0 : i32
    return %arg0, %c0_i32 : i32, i32
  }
  func.func @transform_18(%arg0: i32) -> (i32, i32) {
    %c0_i32 = arith.constant 0 : i32
    %c0_i32_0 = arith.constant 0 : i32
    return %arg0, %c0_i32 : i32, i32
  }
}

</mosaic_0001>

<llo_original>
// kernel: autoencoder_forward.1
$region0: #{autoencoder_forward.1}
  #allocation0 [shape = 'u32[]', space=smem, size = 0x4, offset = 0x4, fixed_abs, tag = 'smem constant byte address 0x4 - core index']
  #allocation1 [shape = 'u32[72,128]{1,0:T(1,128)}', space=vmem, size = 0x9000, scoped, tag = 'internal scratch']
  %s0 = inlined_call_operand.vmem [shape: bf16[12,784], index: 0, kind: input, shape index: {}]
  %s1 = inlined_call_operand.vmem [shape: bf16[784,128], index: 1, kind: input, shape index: {}]
  %s2 = inlined_call_operand.vmem [shape: f32[1,128], index: 2, kind: input, shape index: {}]
  %s3 = inlined_call_operand.vmem [shape: bf16[128,64], index: 3, kind: input, shape index: {}]
  %s4 = inlined_call_operand.vmem [shape: f32[1,64], index: 4, kind: input, shape index: {}]
  %s5 = inlined_call_operand.vmem [shape: bf16[64,12], index: 5, kind: input, shape index: {}]
  %s6 = inlined_call_operand.vmem [shape: f32[1,12], index: 6, kind: input, shape index: {}]
  %s7 = inlined_call_operand.vmem [shape: bf16[12,3], index: 7, kind: input, shape index: {}]
  %s8 = inlined_call_operand.vmem [shape: f32[1,3], index: 8, kind: input, shape index: {}]
  %s9 = inlined_call_operand.vmem [shape: bf16[3,12], index: 9, kind: input, shape index: {}]
  %s10 = inlined_call_operand.vmem [shape: f32[1,12], index: 10, kind: input, shape index: {}]
  %s11 = inlined_call_operand.vmem [shape: bf16[12,64], index: 11, kind: input, shape index: {}]
  %s12 = inlined_call_operand.vmem [shape: f32[1,64], index: 12, kind: input, shape index: {}]
  %s13 = inlined_call_operand.vmem [shape: bf16[64,128], index: 13, kind: input, shape index: {}]
  %s14 = inlined_call_operand.vmem [shape: f32[1,128], index: 14, kind: input, shape index: {}]
  %s15 = inlined_call_operand.vmem [shape: bf16[128,784], index: 15, kind: input, shape index: {}]
  %s16 = inlined_call_operand.vmem [shape: f32[1,784], index: 16, kind: input, shape index: {}]
  %s17 = inlined_call_operand.vmem [shape: f32[12,3], index: 17, kind: output, shape index: {0}]
  %s18 = inlined_call_operand.hbm [shape: bf16[12,784], index: 18, kind: output, shape index: {1}]
  %19 = xla_tuple %s17, %s18
  %s20 = sld [smem:[#allocation0]]
  $region86: #{autoencoder_forward.1} parent=0
    _
  %s22 = ssub.s32 1, %s20
  %s23 = scalar_select 0, %s22, %s20
  $region1: #{autoencoder_forward.1} parent=0
    #allocation2 [shape = 'u8[28672]{0}', space=vmem, size = 0x7000, scoped, tag = 'output window, operand 1, single buffered']
    #allocation3 [shape = 's32[1]{0}', space=sflag, size = 0x4, scoped, tag = 'scoped memory for autoencoder_forward.1']
    %24 = vsyncpa [#allocation3], 0
    // Predicated region
    $region2: #{autoencoder_forward.1} parent=1 // pred_check
      _
    $region3: #{autoencoder_forward.1} parent=1 // pred_check_branch
      %26 = sbr.rel (0) target = $region5
    $region4: #{autoencoder_forward.1} parent=1 // pred_region
      _
    $region5: #{autoencoder_forward.1} parent=1 // pred_fallthru
      _
    // Predicated region
    $region6: #{autoencoder_forward.1} parent=1 // pred_check
      _
    $region7: #{autoencoder_forward.1} parent=1 // pred_check_branch
      %28 = sbr.rel (0) target = $region9
    $region8: #{autoencoder_forward.1} parent=1 // pred_region
      _
    $region9: #{autoencoder_forward.1} parent=1 // pred_fallthru
      _
    // Predicated region
    $region10: #{autoencoder_forward.1} parent=1 // pred_check
      _
    $region11: #{autoencoder_forward.1} parent=1 // pred_check_branch
      %30 = sbr.rel (0) target = $region13
    $region12: #{autoencoder_forward.1} parent=1 // pred_region
      _
    $region13: #{autoencoder_forward.1} parent=1 // pred_fallthru
      _
    // Predicated region
    $region14: #{autoencoder_forward.1} parent=1 // pred_check
      _
    $region15: #{autoencoder_forward.1} parent=1 // pred_check_branch
      %32 = sbr.rel (0) target = $region17
    $region16: #{autoencoder_forward.1} parent=1 // pred_region
      _
    $region17: #{autoencoder_forward.1} parent=1 // pred_fallthru
      _
    // Predicated region
    $region18: #{autoencoder_forward.1} parent=1 // pred_check
      _
    $region19: #{autoencoder_forward.1} parent=1 // pred_check_branch
      %34 = sbr.rel (0) target = $region21
    $region20: #{autoencoder_forward.1} parent=1 // pred_region
      _
    $region21: #{autoencoder_forward.1} parent=1 // pred_fallthru
      _
    // Predicated region
    $region22: #{autoencoder_forward.1} parent=1 // pred_check
      _
    $region23: #{autoencoder_forward.1} parent=1 // pred_check_branch
      %36 = sbr.rel (0) target = $region25
    $region24: #{autoencoder_forward.1} parent=1 // pred_region
      _
    $region25: #{autoencoder_forward.1} parent=1 // pred_fallthru
      _
    // Predicated region
    $region26: #{autoencoder_forward.1} parent=1 // pred_check
      _
    $region27: #{autoencoder_forward.1} parent=1 // pred_check_branch
      %38 = sbr.rel (0) target = $region29
    $region28: #{autoencoder_forward.1} parent=1 // pred_region
      _
    $region29: #{autoencoder_forward.1} parent=1 // pred_fallthru
      _
    // Predicated region
    $region30: #{autoencoder_forward.1} parent=1 // pred_check
      _
    $region31: #{autoencoder_forward.1} parent=1 // pred_check_branch
      %40 = sbr.rel (0) target = $region33
    $region32: #{autoencoder_forward.1} parent=1 // pred_region
      _
    $region33: #{autoencoder_forward.1} parent=1 // pred_fallthru
      _
    // Predicated region
    $region34: #{autoencoder_forward.1} parent=1 // pred_check
      _
    $region35: #{autoencoder_forward.1} parent=1 // pred_check_branch
      %42 = sbr.rel (0) target = $region37
    $region36: #{autoencoder_forward.1} parent=1 // pred_region
      _
    $region37: #{autoencoder_forward.1} parent=1 // pred_fallthru
      _
    // Predicated region
    $region38: #{autoencoder_forward.1} parent=1 // pred_check
      _
    $region39: #{autoencoder_forward.1} parent=1 // pred_check_branch
      %44 = sbr.rel (0) target = $region41
    $region40: #{autoencoder_forward.1} parent=1 // pred_region
      _
    $region41: #{autoencoder_forward.1} parent=1 // pred_fallthru
      _
    // Predicated region
    $region42: #{autoencoder_forward.1} parent=1 // pred_check
      _
    $region43: #{autoencoder_forward.1} parent=1 // pred_check_branch
      %46 = sbr.rel (0) target = $region45
    $region44: #{autoencoder_forward.1} parent=1 // pred_region
      _
    $region45: #{autoencoder_forward.1} parent=1 // pred_fallthru
      _
    // Predicated region
    $region46: #{autoencoder_forward.1} parent=1 // pred_check
      _
    $region47: #{autoencoder_forward.1} parent=1 // pred_check_branch
      %48 = sbr.rel (0) target = $region49
    $region48: #{autoencoder_forward.1} parent=1 // pred_region
      _
    $region49: #{autoencoder_forward.1} parent=1 // pred_fallthru
      _
    // Predicated region
    $region50: #{autoencoder_forward.1} parent=1 // pred_check
      _
    $region51: #{autoencoder_forward.1} parent=1 // pred_check_branch
      %50 = sbr.rel (0) target = $region53
    $region52: #{autoencoder_forward.1} parent=1 // pred_region
      _
    $region53: #{autoencoder_forward.1} parent=1 // pred_fallthru
      _
    // Predicated region
    $region54: #{autoencoder_forward.1} parent=1 // pred_check
      _
    $region55: #{autoencoder_forward.1} parent=1 // pred_check_branch
      %52 = sbr.rel (0) target = $region57
    $region56: #{autoencoder_forward.1} parent=1 // pred_region
      _
    $region57: #{autoencoder_forward.1} parent=1 // pred_fallthru
      _
    // Predicated region
    $region58: #{autoencoder_forward.1} parent=1 // pred_check
      _
    $region59: #{autoencoder_forward.1} parent=1 // pred_check_branch
      %54 = sbr.rel (0) target = $region61
    $region60: #{autoencoder_forward.1} parent=1 // pred_region
      _
    $region61: #{autoencoder_forward.1} parent=1 // pred_fallthru
      _
    // Predicated region
    $region62: #{autoencoder_forward.1} parent=1 // pred_check
      _
    $region63: #{autoencoder_forward.1} parent=1 // pred_check_branch
      %56 = sbr.rel (0) target = $region65
    $region64: #{autoencoder_forward.1} parent=1 // pred_region
      _
    $region65: #{autoencoder_forward.1} parent=1 // pred_fallthru
      _
    // Predicated region
    $region66: #{autoencoder_forward.1} parent=1 // pred_check
      _
    $region67: #{autoencoder_forward.1} parent=1 // pred_check_branch
      %58 = sbr.rel (0) target = $region69
    $region68: #{autoencoder_forward.1} parent=1 // pred_region
      _
    $region69: #{autoencoder_forward.1} parent=1 // pred_fallthru
      _
    %v60 = vld [vmem:[%s0] sm:$0xff]
    %v61 = vld [vmem:[%s0 + $0x8] sm:$0xff]
    %v62 = vld [vmem:[%s0 + $0x10] sm:$0xff]
    %v63 = vld [vmem:[%s0 + $0x18] sm:$0xf]
    %v64 = vld [vmem:[%s0 + $0x1c] sm:$0xff]
    %v65 = vld [vmem:[%s0 + $0x24] sm:$0xff]
    %v66 = vld [vmem:[%s0 + $0x2c] sm:$0xff]
    %v67 = vld [vmem:[%s0 + $0x34] sm:$0xf]
    %v68 = vld [vmem:[%s1] sm:$0xf]
    %v69 = vld [vmem:[%s1 + $0x4] sm:$0xf]
    %v70 = vld [vmem:[%s1 + $0x8] sm:$0xf]
    %v71 = vld [vmem:[%s1 + $0xc] sm:$0xf]
    %v72 = vld [vmem:[%s1 + $0x10] sm:$0xf]
    %v73 = vld [vmem:[%s1 + $0x14] sm:$0xf]
    %v74 = vld [vmem:[%s1 + $0x18] sm:$0xf]
    %v75 = vld [vmem:[%s1 + $0x1c] sm:$0xf]
    %v76 = vld [vmem:[%s1 + $0x20] sm:$0xf]
    %v77 = vld [vmem:[%s1 + $0x24] sm:$0xf]
    %v78 = vld [vmem:[%s1 + $0x28] sm:$0xf]
    %v79 = vld [vmem:[%s1 + $0x2c] sm:$0xf]
    %v80 = vld [vmem:[%s1 + $0x30] sm:$0xf]
    %v81 = vld [vmem:[%s1 + $0x34] sm:$0xf]
    %v82 = vld [vmem:[%s1 + $0x38] sm:$0xf]
    %v83 = vld [vmem:[%s1 + $0x3c] sm:$0xf]
    %v84 = vld [vmem:[%s1 + $0x40] sm:$0xf]
    %v85 = vld [vmem:[%s1 + $0x44] sm:$0xf]
    %v86 = vld [vmem:[%s1 + $0x48] sm:$0xf]
    %v87 = vld [vmem:[%s1 + $0x4c] sm:$0xf]
    %v88 = vld [vmem:[%s1 + $0x50] sm:$0xf]
    %v89 = vld [vmem:[%s1 + $0x54] sm:$0xf]
    %v90 = vld [vmem:[%s1 + $0x58] sm:$0xf]
    %v91 = vld [vmem:[%s1 + $0x5c] sm:$0xf]
    %v92 = vld [vmem:[%s1 + $0x60] sm:$0xf]
    %v93 = vld [vmem:[%s1 + $0x64] sm:$0xf]
    %v94 = vld [vmem:[%s1 + $0x68] sm:$0xf]
    %v95 = vld [vmem:[%s1 + $0x6c] sm:$0xf]
    %v96 = vld [vmem:[%s1 + $0x70] sm:$0xf]
    %v97 = vld [vmem:[%s1 + $0x74] sm:$0xf]
    %v98 = vld [vmem:[%s1 + $0x78] sm:$0xf]
    %v99 = vld [vmem:[%s1 + $0x7c] sm:$0xf]
    %v100 = vld [vmem:[%s1 + $0x80] sm:$0xf]
    %v101 = vld [vmem:[%s1 + $0x84] sm:$0xf]
    %v102 = vld [vmem:[%s1 + $0x88] sm:$0xf]
    %v103 = vld [vmem:[%s1 + $0x8c] sm:$0xf]
    %v104 = vld [vmem:[%s1 + $0x90] sm:$0xf]
    %v105 = vld [vmem:[%s1 + $0x94] sm:$0xf]
    %v106 = vld [vmem:[%s1 + $0x98] sm:$0xf]
    %v107 = vld [vmem:[%s1 + $0x9c] sm:$0xf]
    %v108 = vld [vmem:[%s1 + $0xa0] sm:$0xf]
    %v109 = vld [vmem:[%s1 + $0xa4] sm:$0xf]
    %v110 = vld [vmem:[%s1 + $0xa8] sm:$0xf]
    %v111 = vld [vmem:[%s1 + $0xac] sm:$0xf]
    %v112 = vld [vmem:[%s1 + $0xb0] sm:$0xf]
    %v113 = vld [vmem:[%s1 + $0xb4] sm:$0xf]
    %v114 = vld [vmem:[%s1 + $0xb8] sm:$0xf]
    %v115 = vld [vmem:[%s1 + $0xbc] sm:$0xf]
    %v116 = vld [vmem:[%s1 + $0xc0] sm:$0xf]
    %v117 = vld [vmem:[%s1 + $0xc4] sm:$0xf]
    %v118 = vld [vmem:[%s1 + $0xc8] sm:$0xf]
    %v119 = vld [vmem:[%s1 + $0xcc] sm:$0xf]
    %v120 = vld [vmem:[%s1 + $0xd0] sm:$0xf]
    %v121 = vld [vmem:[%s1 + $0xd4] sm:$0xf]
    %v122 = vld [vmem:[%s1 + $0xd8] sm:$0xf]
    %v123 = vld [vmem:[%s1 + $0xdc] sm:$0xf]
    %v124 = vld [vmem:[%s1 + $0xe0] sm:$0xf]
    %v125 = vld [vmem:[%s1 + $0xe4] sm:$0xf]
    %v126 = vld [vmem:[%s1 + $0xe8] sm:$0xf]
    %v127 = vld [vmem:[%s1 + $0xec] sm:$0xf]
    %v128 = vld [vmem:[%s1 + $0xf0] sm:$0xf]
    %v129 = vld [vmem:[%s1 + $0xf4] sm:$0xf]
    %v130 = vld [vmem:[%s1 + $0xf8] sm:$0xf]
    %v131 = vld [vmem:[%s1 + $0xfc] sm:$0xf]
    %v132 = vld [vmem:[%s1 + $0x100] sm:$0xf]
    %v133 = vld [vmem:[%s1 + $0x104] sm:$0xf]
    %v134 = vld [vmem:[%s1 + $0x108] sm:$0xf]
    %v135 = vld [vmem:[%s1 + $0x10c] sm:$0xf]
    %v136 = vld [vmem:[%s1 + $0x110] sm:$0xf]
    %v137 = vld [vmem:[%s1 + $0x114] sm:$0xf]
    %v138 = vld [vmem:[%s1 + $0x118] sm:$0xf]
    %v139 = vld [vmem:[%s1 + $0x11c] sm:$0xf]
    %v140 = vld [vmem:[%s1 + $0x120] sm:$0xf]
    %v141 = vld [vmem:[%s1 + $0x124] sm:$0xf]
    %v142 = vld [vmem:[%s1 + $0x128] sm:$0xf]
    %v143 = vld [vmem:[%s1 + $0x12c] sm:$0xf]
    %v144 = vld [vmem:[%s1 + $0x130] sm:$0xf]
    %v145 = vld [vmem:[%s1 + $0x134] sm:$0xf]
    %v146 = vld [vmem:[%s1 + $0x138] sm:$0xf]
    %v147 = vld [vmem:[%s1 + $0x13c] sm:$0xf]
    %v148 = vld [vmem:[%s1 + $0x140] sm:$0xf]
    %v149 = vld [vmem:[%s1 + $0x144] sm:$0xf]
    %v150 = vld [vmem:[%s1 + $0x148] sm:$0xf]
    %v151 = vld [vmem:[%s1 + $0x14c] sm:$0xf]
    %v152 = vld [vmem:[%s1 + $0x150] sm:$0xf]
    %v153 = vld [vmem:[%s1 + $0x154] sm:$0xf]
    %v154 = vld [vmem:[%s1 + $0x158] sm:$0xf]
    %v155 = vld [vmem:[%s1 + $0x15c] sm:$0xf]
    %v156 = vld [vmem:[%s1 + $0x160] sm:$0xf]
    %v157 = vld [vmem:[%s1 + $0x164] sm:$0xf]
    %v158 = vld [vmem:[%s1 + $0x168] sm:$0xf]
    %v159 = vld [vmem:[%s1 + $0x16c] sm:$0xf]
    %v160 = vld [vmem:[%s1 + $0x170] sm:$0xf]
    %v161 = vld [vmem:[%s1 + $0x174] sm:$0xf]
    %v162 = vld [vmem:[%s1 + $0x178] sm:$0xf]
    %v163 = vld [vmem:[%s1 + $0x17c] sm:$0xf]
    %v164 = vld [vmem:[%s1 + $0x180] sm:$0xf]
    %v165 = vld [vmem:[%s1 + $0x184] sm:$0xf]
    %v166 = vld [vmem:[%s2] sm:$0x1]
    %v168 = vperm.slane %v166, 0
    %v178 = vunpack.c.l.b16 %v60
    %v179 = vunpack.c.h.b16 %v60
    %v180 = vunpack.c.l.b16 %v61
    %v181 = vunpack.c.h.b16 %v61
    %v182 = vunpack.c.l.b16 %v62
    %v183 = vunpack.c.h.b16 %v62
    %v184 = vunpack.c.l.b16 %v63
    %v185 = vunpack.c.l.b16 %v64
    %v186 = vunpack.c.h.b16 %v64
    %v187 = vunpack.c.l.b16 %v65
    %v188 = vunpack.c.h.b16 %v65
    %v189 = vunpack.c.l.b16 %v66
    %v190 = vunpack.c.h.b16 %v66
    %v191 = vunpack.c.l.b16 %v67
    %v192 = vpack.c.b16 %v185, %v178
    %v193 = vpack.c.b16 %v186, %v179
    %v194 = vpack.c.b16 %v187, %v180
    %v195 = vpack.c.b16 %v188, %v181
    %v196 = vpack.c.b16 %v189, %v182
    %v197 = vpack.c.b16 %v190, %v183
    %v198 = vpack.c.b16 %v191, %v184
    %v303 = vunpack.c.l.b16 %v68
    %v304 = vunpack.c.l.b16 %v69
    %v305 = vunpack.c.l.b16 %v70
    %v306 = vunpack.c.l.b16 %v71
    %v307 = vunpack.c.l.b16 %v72
    %v308 = vunpack.c.l.b16 %v73
    %v309 = vunpack.c.l.b16 %v74
    %v310 = vunpack.c.l.b16 %v75
    %v311 = vunpack.c.l.b16 %v76
    %v312 = vunpack.c.l.b16 %v77
    %v313 = vunpack.c.l.b16 %v78
    %v314 = vunpack.c.l.b16 %v79
    %v315 = vunpack.c.l.b16 %v80
    %v316 = vunpack.c.l.b16 %v81
    %v317 = vunpack.c.l.b16 %v82
    %v318 = vunpack.c.l.b16 %v83
    %v319 = vunpack.c.l.b16 %v84
    %v320 = vunpack.c.l.b16 %v85
    %v321 = vunpack.c.l.b16 %v86
    %v322 = vunpack.c.l.b16 %v87
    %v323 = vunpack.c.l.b16 %v88
    %v324 = vunpack.c.l.b16 %v89
    %v325 = vunpack.c.l.b16 %v90
    %v326 = vunpack.c.l.b16 %v91
    %v327 = vunpack.c.l.b16 %v92
    %v328 = vunpack.c.l.b16 %v93
    %v329 = vunpack.c.l.b16 %v94
    %v330 = vunpack.c.l.b16 %v95
    %v331 = vunpack.c.l.b16 %v96
    %v332 = vunpack.c.l.b16 %v97
    %v333 = vunpack.c.l.b16 %v98
    %v334 = vunpack.c.l.b16 %v99
    %v335 = vunpack.c.l.b16 %v100
    %v336 = vunpack.c.l.b16 %v101
    %v337 = vunpack.c.l.b16 %v102
    %v338 = vunpack.c.l.b16 %v103
    %v339 = vunpack.c.l.b16 %v104
    %v340 = vunpack.c.l.b16 %v105
    %v341 = vunpack.c.l.b16 %v106
    %v342 = vunpack.c.l.b16 %v107
    %v343 = vunpack.c.l.b16 %v108
    %v344 = vunpack.c.l.b16 %v109
    %v345 = vunpack.c.l.b16 %v110
    %v346 = vunpack.c.l.b16 %v111
    %v347 = vunpack.c.l.b16 %v112
    %v348 = vunpack.c.l.b16 %v113
    %v349 = vunpack.c.l.b16 %v114
    %v350 = vunpack.c.l.b16 %v115
    %v351 = vunpack.c.l.b16 %v116
    %v352 = vunpack.c.l.b16 %v117
    %v353 = vunpack.c.l.b16 %v118
    %v354 = vunpack.c.l.b16 %v119
    %v355 = vunpack.c.l.b16 %v120
    %v356 = vunpack.c.l.b16 %v121
    %v357 = vunpack.c.l.b16 %v122
    %v358 = vunpack.c.l.b16 %v123
    %v359 = vunpack.c.l.b16 %v124
    %v360 = vunpack.c.l.b16 %v125
    %v361 = vunpack.c.l.b16 %v126
    %v362 = vunpack.c.l.b16 %v127
    %v363 = vunpack.c.l.b16 %v128
    %v364 = vunpack.c.l.b16 %v129
    %v365 = vunpack.c.l.b16 %v130
    %v366 = vunpack.c.l.b16 %v131
    %v367 = vunpack.c.l.b16 %v132
    %v368 = vunpack.c.l.b16 %v133
    %v369 = vunpack.c.l.b16 %v134
    %v370 = vunpack.c.l.b16 %v135
    %v371 = vunpack.c.l.b16 %v136
    %v372 = vunpack.c.l.b16 %v137
    %v373 = vunpack.c.l.b16 %v138
    %v374 = vunpack.c.l.b16 %v139
    %v375 = vunpack.c.l.b16 %v140
    %v376 = vunpack.c.l.b16 %v141
    %v377 = vunpack.c.l.b16 %v142
    %v378 = vunpack.c.l.b16 %v143
    %v379 = vunpack.c.l.b16 %v144
    %v380 = vunpack.c.l.b16 %v145
    %v381 = vunpack.c.l.b16 %v146
    %v382 = vunpack.c.l.b16 %v147
    %v383 = vunpack.c.l.b16 %v148
    %v384 = vunpack.c.l.b16 %v149
    %v385 = vunpack.c.l.b16 %v150
    %v386 = vunpack.c.l.b16 %v151
    %v387 = vunpack.c.l.b16 %v152
    %v388 = vunpack.c.l.b16 %v153
    %v389 = vunpack.c.l.b16 %v154
    %v390 = vunpack.c.l.b16 %v155
    %v391 = vunpack.c.l.b16 %v156
    %v392 = vunpack.c.l.b16 %v157
    %v393 = vunpack.c.l.b16 %v158
    %v394 = vunpack.c.l.b16 %v159
    %v395 = vunpack.c.l.b16 %v160
    %v396 = vunpack.c.l.b16 %v161
    %v397 = vunpack.c.l.b16 %v162
    %v398 = vunpack.c.l.b16 %v163
    %v399 = vunpack.c.l.b16 %v164
    %v400 = vunpack.c.l.b16 %v165
    %v401 = vpack.c.b16 %v304, %v303
    %v402 = vpack.c.b16 %v306, %v305
    %v403 = vpack.c.b16 %v308, %v307
    %v404 = vpack.c.b16 %v310, %v309
    %v405 = vpack.c.b16 %v312, %v311
    %v406 = vpack.c.b16 %v314, %v313
    %v407 = vpack.c.b16 %v316, %v315
    %v408 = vpack.c.b16 %v318, %v317
    %v409 = vpack.c.b16 %v320, %v319
    %v410 = vpack.c.b16 %v322, %v321
    %v411 = vpack.c.b16 %v324, %v323
    %v412 = vpack.c.b16 %v326, %v325
    %v413 = vpack.c.b16 %v328, %v327
    %v414 = vpack.c.b16 %v330, %v329
    %v415 = vpack.c.b16 %v332, %v331
    %v416 = vpack.c.b16 %v334, %v333
    %v417 = vpack.c.b16 %v336, %v335
    %v418 = vpack.c.b16 %v338, %v337
    %v419 = vpack.c.b16 %v340, %v339
    %v420 = vpack.c.b16 %v342, %v341
    %v421 = vpack.c.b16 %v344, %v343
    %v422 = vpack.c.b16 %v346, %v345
    %v423 = vpack.c.b16 %v348, %v347
    %v424 = vpack.c.b16 %v350, %v349
    %v425 = vpack.c.b16 %v352, %v351
    %v426 = vpack.c.b16 %v354, %v353
    %v427 = vpack.c.b16 %v356, %v355
    %v428 = vpack.c.b16 %v358, %v357
    %v429 = vpack.c.b16 %v360, %v359
    %v430 = vpack.c.b16 %v362, %v361
    %v431 = vpack.c.b16 %v364, %v363
    %v432 = vpack.c.b16 %v366, %v365
    %v433 = vpack.c.b16 %v368, %v367
    %v434 = vpack.c.b16 %v370, %v369
    %v435 = vpack.c.b16 %v372, %v371
    %v436 = vpack.c.b16 %v374, %v373
    %v437 = vpack.c.b16 %v376, %v375
    %v438 = vpack.c.b16 %v378, %v377
    %v439 = vpack.c.b16 %v380, %v379
    %v440 = vpack.c.b16 %v382, %v381
    %v441 = vpack.c.b16 %v384, %v383
    %v442 = vpack.c.b16 %v386, %v385
    %v443 = vpack.c.b16 %v388, %v387
    %v444 = vpack.c.b16 %v390, %v389
    %v445 = vpack.c.b16 %v392, %v391
    %v446 = vpack.c.b16 %v394, %v393
    %v447 = vpack.c.b16 %v396, %v395
    %v448 = vpack.c.b16 %v398, %v397
    %v449 = vpack.c.b16 %v400, %v399
    %vm499 = vcmask 130048
    %v501 = vsel %vm499, %v198, 0
    %503 = vmatpush.bf16.msra.mxu0 %v408
    %504 = vmatpush.bf16.msra.mxu0 %v407
    %505 = vmatpush.bf16.msra.mxu0 %v406
    %506 = vmatpush.bf16.msra.mxu0 %v405
    %507 = vmatpush.bf16.msra.mxu0 %v404
    %508 = vmatpush.bf16.msra.mxu0 %v403
    %509 = vmatpush.bf16.msra.mxu0 %v402
    %510 = vmatpush.bf16.msra.mxu0 %v401
    %511 = vmatmul.bf16.gmra.mxu0 %v192
    %v512 = vpop.f32.mrf.mxu0
    %v513 = vadd.f32 %v168, %v512
    %v514 = vpop.f32.mrf.mxu0
    %v515 = vadd.f32 %v168, %v514
    %516 = vdwg.mxu0
    %517 = vmatpush.bf16.msra.mxu0 %v416
    %518 = vmatpush.bf16.msra.mxu0 %v415
    %519 = vmatpush.bf16.msra.mxu0 %v414
    %520 = vmatpush.bf16.msra.mxu0 %v413
    %521 = vmatpush.bf16.msra.mxu0 %v412
    %522 = vmatpush.bf16.msra.mxu0 %v411
    %523 = vmatpush.bf16.msra.mxu0 %v410
    %524 = vmatpush.bf16.msra.mxu0 %v409
    %525 = vmatmul.bf16.gmra.mxu0 %v193
    %v526 = vpop.f32.mrf.mxu0
    %v527 = vadd.f32 %v513, %v526
    %v528 = vpop.f32.mrf.mxu0
    %v529 = vadd.f32 %v515, %v528
    %530 = vdwg.mxu0
    %531 = vmatpush.bf16.msra.mxu0 %v424
    %532 = vmatpush.bf16.msra.mxu0 %v423
    %533 = vmatpush.bf16.msra.mxu0 %v422
    %534 = vmatpush.bf16.msra.mxu0 %v421
    %535 = vmatpush.bf16.msra.mxu0 %v420
    %536 = vmatpush.bf16.msra.mxu0 %v419
    %537 = vmatpush.bf16.msra.mxu0 %v418
    %538 = vmatpush.bf16.msra.mxu0 %v417
    %539 = vmatmul.bf16.gmra.mxu0 %v194
    %v540 = vpop.f32.mrf.mxu0
    %v541 = vadd.f32 %v527, %v540
    %v542 = vpop.f32.mrf.mxu0
    %v543 = vadd.f32 %v529, %v542
    %544 = vdwg.mxu0
    %545 = vmatpush.bf16.msra.mxu0 %v432
    %546 = vmatpush.bf16.msra.mxu0 %v431
    %547 = vmatpush.bf16.msra.mxu0 %v430
    %548 = vmatpush.bf16.msra.mxu0 %v429
    %549 = vmatpush.bf16.msra.mxu0 %v428
    %550 = vmatpush.bf16.msra.mxu0 %v427
    %551 = vmatpush.bf16.msra.mxu0 %v426
    %552 = vmatpush.bf16.msra.mxu0 %v425
    %553 = vmatmul.bf16.gmra.mxu0 %v195
    %v554 = vpop.f32.mrf.mxu0
    %v555 = vadd.f32 %v541, %v554
    %v556 = vpop.f32.mrf.mxu0
    %v557 = vadd.f32 %v543, %v556
    %558 = vdwg.mxu0
    %559 = vmatpush.bf16.msra.mxu0 %v440
    %560 = vmatpush.bf16.msra.mxu0 %v439
    %561 = vmatpush.bf16.msra.mxu0 %v438
    %562 = vmatpush.bf16.msra.mxu0 %v437
    %563 = vmatpush.bf16.msra.mxu0 %v436
    %564 = vmatpush.bf16.msra.mxu0 %v435
    %565 = vmatpush.bf16.msra.mxu0 %v434
    %566 = vmatpush.bf16.msra.mxu0 %v433
    %567 = vmatmul.bf16.gmra.mxu0 %v196
    %v568 = vpop.f32.mrf.mxu0
    %v569 = vadd.f32 %v555, %v568
    %v570 = vpop.f32.mrf.mxu0
    %v571 = vadd.f32 %v557, %v570
    %572 = vdwg.mxu0
    %573 = vmatpush.bf16.msra.mxu0 %v448
    %574 = vmatpush.bf16.msra.mxu0 %v447
    %575 = vmatpush.bf16.msra.mxu0 %v446
    %576 = vmatpush.bf16.msra.mxu0 %v445
    %577 = vmatpush.bf16.msra.mxu0 %v444
    %578 = vmatpush.bf16.msra.mxu0 %v443
    %579 = vmatpush.bf16.msra.mxu0 %v442
    %580 = vmatpush.bf16.msra.mxu0 %v441
    %581 = vmatmul.bf16.gmra.mxu0 %v197
    %v582 = vpop.f32.mrf.mxu0
    %v583 = vadd.f32 %v569, %v582
    %v584 = vpop.f32.mrf.mxu0
    %v585 = vadd.f32 %v571, %v584
    %586 = vdwg.mxu0
    %587 = vmatpush.bf16.msra.mxu0 0
    %588 = vmatpush.bf16.msra.mxu0 0
    %589 = vmatpush.bf16.msra.mxu0 0
    %590 = vmatpush.bf16.msra.mxu0 0
    %591 = vmatpush.bf16.msra.mxu0 0
    %592 = vmatpush.bf16.msra.mxu0 0
    %593 = vmatpush.bf16.msra.mxu0 0
    %594 = vmatpush.bf16.msra.mxu0 %v449
    %595 = vmatmul.bf16.gmra.mxu0 %v501
    %v596 = vpop.f32.mrf.mxu0
    %v597 = vadd.f32 %v583, %v596
    %v598 = vpop.f32.mrf.mxu0
    %v599 = vadd.f32 %v585, %v598
    %600 = vdwg.mxu0
    %v601 = vpack.c.bf16 %v599, %v597
    %v602 = vunpack.c.l.bf16 %v601
    %v603 = vunpack.c.h.bf16 %v601
    %v604 = vtanh.pop %v602
    %v605 = vtanh.pop %v603
    %v606 = vpack.c.bf16 %v605, %v604
    %v607 = vld [vmem:[%s3] sm:$0xf]
    %v608 = vld [vmem:[%s3 + $0x4] sm:$0xf]
    %v609 = vld [vmem:[%s3 + $0x8] sm:$0xf]
    %v610 = vld [vmem:[%s3 + $0xc] sm:$0xf]
    %v611 = vld [vmem:[%s3 + $0x10] sm:$0xf]
    %v612 = vld [vmem:[%s3 + $0x14] sm:$0xf]
    %v613 = vld [vmem:[%s3 + $0x18] sm:$0xf]
    %v614 = vld [vmem:[%s3 + $0x1c] sm:$0xf]
    %v615 = vld [vmem:[%s3 + $0x20] sm:$0xf]
    %v616 = vld [vmem:[%s3 + $0x24] sm:$0xf]
    %v617 = vld [vmem:[%s3 + $0x28] sm:$0xf]
    %v618 = vld [vmem:[%s3 + $0x2c] sm:$0xf]
    %v619 = vld [vmem:[%s3 + $0x30] sm:$0xf]
    %v620 = vld [vmem:[%s3 + $0x34] sm:$0xf]
    %v621 = vld [vmem:[%s3 + $0x38] sm:$0xf]
    %v622 = vld [vmem:[%s3 + $0x3c] sm:$0xf]
    %v623 = vld [vmem:[%s4] sm:$0x1]
    %v625 = vperm.slane %v623, 0
    %v643 = vunpack.c.l.b16 %v607
    %v644 = vunpack.c.l.b16 %v608
    %v645 = vunpack.c.l.b16 %v609
    %v646 = vunpack.c.l.b16 %v610
    %v647 = vunpack.c.l.b16 %v611
    %v648 = vunpack.c.l.b16 %v612
    %v649 = vunpack.c.l.b16 %v613
    %v650 = vunpack.c.l.b16 %v614
    %v651 = vunpack.c.l.b16 %v615
    %v652 = vunpack.c.l.b16 %v616
    %v653 = vunpack.c.l.b16 %v617
    %v654 = vunpack.c.l.b16 %v618
    %v655 = vunpack.c.l.b16 %v619
    %v656 = vunpack.c.l.b16 %v620
    %v657 = vunpack.c.l.b16 %v621
    %v658 = vunpack.c.l.b16 %v622
    %v659 = vpack.c.b16 %v644, %v643
    %v660 = vpack.c.b16 %v646, %v645
    %v661 = vpack.c.b16 %v648, %v647
    %v662 = vpack.c.b16 %v650, %v649
    %v663 = vpack.c.b16 %v652, %v651
    %v664 = vpack.c.b16 %v654, %v653
    %v665 = vpack.c.b16 %v656, %v655
    %v666 = vpack.c.b16 %v658, %v657
    %675 = vmatpush.bf16.msra.mxu0 %v666
    %676 = vmatpush.bf16.msra.mxu0 %v665
    %677 = vmatpush.bf16.msra.mxu0 %v664
    %678 = vmatpush.bf16.msra.mxu0 %v663
    %679 = vmatpush.bf16.msra.mxu0 %v662
    %680 = vmatpush.bf16.msra.mxu0 %v661
    %681 = vmatpush.bf16.msra.mxu0 %v660
    %682 = vmatpush.bf16.msra.mxu0 %v659
    %683 = vmatmul.bf16.gmra.mxu0 %v606
    %v684 = vpop.f32.mrf.mxu0
    %v685 = vadd.f32 %v625, %v684
    %v686 = vpop.f32.mrf.mxu0
    %v687 = vadd.f32 %v625, %v686
    %688 = vdwg.mxu0
    %v689 = vpack.c.bf16 %v687, %v685
    %v690 = vunpack.c.l.bf16 %v689
    %v691 = vunpack.c.h.bf16 %v689
    %v692 = vtanh.pop %v690
    %v693 = vtanh.pop %v691
    %v694 = vpack.c.bf16 %v693, %v692
    %v695 = vld [vmem:[%s5] sm:$0xf]
    %v696 = vld [vmem:[%s5 + $0x4] sm:$0xf]
    %v697 = vld [vmem:[%s5 + $0x8] sm:$0xf]
    %v698 = vld [vmem:[%s5 + $0xc] sm:$0xf]
    %v699 = vld [vmem:[%s5 + $0x10] sm:$0xf]
    %v700 = vld [vmem:[%s5 + $0x14] sm:$0xf]
    %v701 = vld [vmem:[%s5 + $0x18] sm:$0xf]
    %v702 = vld [vmem:[%s5 + $0x1c] sm:$0xf]
    %v703 = vld [vmem:[%s6] sm:$0x1]
    %v705 = vperm.slane %v703, 0
    %v715 = vunpack.c.l.b16 %v695
    %v716 = vunpack.c.l.b16 %v696
    %v717 = vunpack.c.l.b16 %v697
    %v718 = vunpack.c.l.b16 %v698
    %v719 = vunpack.c.l.b16 %v699
    %v720 = vunpack.c.l.b16 %v700
    %v721 = vunpack.c.l.b16 %v701
    %v722 = vunpack.c.l.b16 %v702
    %v723 = vpack.c.b16 %v716, %v715
    %v724 = vpack.c.b16 %v718, %v717
    %v725 = vpack.c.b16 %v720, %v719
    %v726 = vpack.c.b16 %v722, %v721
    %vm731 = vcmask 523264
    %v733 = vsel %vm731, %v694, 0
    %735 = vmatpush.bf16.msra.mxu0 0
    %736 = vmatpush.bf16.msra.mxu0 0
    %737 = vmatpush.bf16.msra.mxu0 0
    %738 = vmatpush.bf16.msra.mxu0 0
    %739 = vmatpush.bf16.msra.mxu0 %v726
    %740 = vmatpush.bf16.msra.mxu0 %v725
    %741 = vmatpush.bf16.msra.mxu0 %v724
    %742 = vmatpush.bf16.msra.mxu0 %v723
    %743 = vmatmul.bf16.gmra.mxu0 %v733
    %v744 = vpop.f32.mrf.mxu0
    %v745 = vadd.f32 %v705, %v744
    %v746 = vpop.f32.mrf.mxu0
    %v747 = vadd.f32 %v705, %v746
    %748 = vdwg.mxu0
    %v749 = vpack.c.bf16 %v747, %v745
    %v750 = vunpack.c.l.bf16 %v749
    %v751 = vunpack.c.h.bf16 %v749
    %v752 = vtanh.pop %v750
    %v753 = vtanh.pop %v751
    %v754 = vpack.c.bf16 %v753, %v752
    %v755 = vld [vmem:[%s7] sm:$0xf]
    %v756 = vld [vmem:[%s7 + $0x4] sm:$0x3]
    %v757 = vld [vmem:[%s8] sm:$0x1]
    %v759 = vperm.slane %v757, 0
    %v763 = vunpack.c.l.b16 %v755
    %v764 = vunpack.c.l.b16 %v756
    %v765 = vpack.c.b16 %v764, %v763
    %vm766 = vcmask 97280
    %v768 = vsel %vm766, %v754, 0
    %vm770 = vcmask 1045504
    %v772 = vsel %vm770, %v765, 0
    %774 = vmatpush.bf16.msra.mxu0 0
    %775 = vmatpush.bf16.msra.mxu0 0
    %776 = vmatpush.bf16.msra.mxu0 0
    %777 = vmatpush.bf16.msra.mxu0 0
    %778 = vmatpush.bf16.msra.mxu0 0
    %779 = vmatpush.bf16.msra.mxu0 0
    %780 = vmatpush.bf16.msra.mxu0 0
    %781 = vmatpush.bf16.msra.mxu0 %v772
    %782 = vmatmul.bf16.gmra.mxu0 %v768
    %v783 = vpop.f32.mrf.mxu0
    %v784 = vadd.f32 %v759, %v783
    %v785 = vpop.f32.mrf.mxu0
    %v786 = vadd.f32 %v759, %v785
    %787 = vdwg.mxu0
    %vm788 = vcmask 23552
    %789 = vst.msk [vmem:[%s17] sm:$0xff] %vm788, %v784
    %790 = vst.msk [vmem:[%s17 + $0x8] sm:$0xff] %vm788, %v786
    %v791 = vpack.c.bf16 %v786, %v784
    %v792 = vld [vmem:[%s9] sm:$0x3]
    %v793 = vld [vmem:[%s10] sm:$0x1]
    %v795 = vperm.slane %v793, 0
    %v798 = vsel %vm788, %v791, 0
    %vm800 = vcmask 1040384
    %vm801 = vcmask 1041408
    %v802 = vsel %vm800, 4294967295, 65535
    %v803 = vsel %vm801, %v802, 0
    %v805 = vand.u32 %v792, %v803
    %807 = vmatpush.bf16.msra.mxu0 0
    %808 = vmatpush.bf16.msra.mxu0 0
    %809 = vmatpush.bf16.msra.mxu0 0
    %810 = vmatpush.bf16.msra.mxu0 0
    %811 = vmatpush.bf16.msra.mxu0 0
    %812 = vmatpush.bf16.msra.mxu0 0
    %813 = vmatpush.bf16.msra.mxu0 0
    %814 = vmatpush.bf16.msra.mxu0 %v805
    %815 = vmatmul.bf16.gmra.mxu0 %v798
    %v816 = vpop.f32.mrf.mxu0
    %v817 = vadd.f32 %v795, %v816
    %v818 = vpop.f32.mrf.mxu0
    %v819 = vadd.f32 %v795, %v818
    %820 = vdwg.mxu0
    %v821 = vpack.c.bf16 %v819, %v817
    %v822 = vunpack.c.l.bf16 %v821
    %v823 = vunpack.c.h.bf16 %v821
    %v824 = vtanh.pop %v822
    %v825 = vtanh.pop %v823
    %v826 = vpack.c.bf16 %v825, %v824
    %v827 = vld [vmem:[%s11] sm:$0xf]
    %v828 = vld [vmem:[%s11 + $0x4] sm:$0x3]
    %v829 = vld [vmem:[%s12] sm:$0x1]
    %v831 = vperm.slane %v829, 0
    %v835 = vunpack.c.l.b16 %v827
    %v836 = vunpack.c.l.b16 %v828
    %v837 = vpack.c.b16 %v836, %v835
    %v839 = vsel %vm766, %v826, 0
    %v842 = vsel %vm770, %v837, 0
    %844 = vmatpush.bf16.msra.mxu0 0
    %845 = vmatpush.bf16.msra.mxu0 0
    %846 = vmatpush.bf16.msra.mxu0 0
    %847 = vmatpush.bf16.msra.mxu0 0
    %848 = vmatpush.bf16.msra.mxu0 0
    %849 = vmatpush.bf16.msra.mxu0 0
    %850 = vmatpush.bf16.msra.mxu0 0
    %851 = vmatpush.bf16.msra.mxu0 %v842
    %852 = vmatmul.bf16.gmra.mxu0 %v839
    %v853 = vpop.f32.mrf.mxu0
    %v854 = vadd.f32 %v831, %v853
    %v855 = vpop.f32.mrf.mxu0
    %v856 = vadd.f32 %v831, %v855
    %857 = vdwg.mxu0
    %v858 = vpack.c.bf16 %v856, %v854
    %v859 = vunpack.c.l.bf16 %v858
    %v860 = vunpack.c.h.bf16 %v858
    %v861 = vtanh.pop %v859
    %v862 = vtanh.pop %v860
    %v863 = vpack.c.bf16 %v862, %v861
    %v864 = vld [vmem:[%s13] sm:$0xf]
    %v865 = vld [vmem:[%s13 + $0x4] sm:$0xf]
    %v866 = vld [vmem:[%s13 + $0x8] sm:$0xf]
    %v867 = vld [vmem:[%s13 + $0xc] sm:$0xf]
    %v868 = vld [vmem:[%s13 + $0x10] sm:$0xf]
    %v869 = vld [vmem:[%s13 + $0x14] sm:$0xf]
    %v870 = vld [vmem:[%s13 + $0x18] sm:$0xf]
    %v871 = vld [vmem:[%s13 + $0x1c] sm:$0xf]
    %v872 = vld [vmem:[%s14] sm:$0x1]
    %v874 = vperm.slane %v872, 0
    %v884 = vunpack.c.l.b16 %v864
    %v885 = vunpack.c.l.b16 %v865
    %v886 = vunpack.c.l.b16 %v866
    %v887 = vunpack.c.l.b16 %v867
    %v888 = vunpack.c.l.b16 %v868
    %v889 = vunpack.c.l.b16 %v869
    %v890 = vunpack.c.l.b16 %v870
    %v891 = vunpack.c.l.b16 %v871
    %v892 = vpack.c.b16 %v885, %v884
    %v893 = vpack.c.b16 %v887, %v886
    %v894 = vpack.c.b16 %v889, %v888
    %v895 = vpack.c.b16 %v891, %v890
    %v901 = vsel %vm731, %v863, 0
    %903 = vmatpush.bf16.msra.mxu0 0
    %904 = vmatpush.bf16.msra.mxu0 0
    %905 = vmatpush.bf16.msra.mxu0 0
    %906 = vmatpush.bf16.msra.mxu0 0
    %907 = vmatpush.bf16.msra.mxu0 %v895
    %908 = vmatpush.bf16.msra.mxu0 %v894
    %909 = vmatpush.bf16.msra.mxu0 %v893
    %910 = vmatpush.bf16.msra.mxu0 %v892
    %911 = vmatmul.bf16.gmra.mxu0 %v901
    %v912 = vpop.f32.mrf.mxu0
    %v913 = vadd.f32 %v874, %v912
    %v914 = vpop.f32.mrf.mxu0
    %v915 = vadd.f32 %v874, %v914
    %916 = vdwg.mxu0
    %v917 = vpack.c.bf16 %v915, %v913
    %v918 = vunpack.c.l.bf16 %v917
    %v919 = vunpack.c.h.bf16 %v917
    %v920 = vtanh.pop %v918
    %v921 = vtanh.pop %v919
    %v922 = vpack.c.bf16 %v921, %v920
    %v923 = vld [vmem:[%s15] sm:$0xff]
    %v924 = vld [vmem:[%s15 + $0x8] sm:$0xff]
    %v925 = vld [vmem:[%s15 + $0x10] sm:$0xff]
    %v926 = vld [vmem:[%s15 + $0x18] sm:$0xf]
    %v927 = vld [vmem:[%s15 + $0x1c] sm:$0xff]
    %v928 = vld [vmem:[%s15 + $0x24] sm:$0xff]
    %v929 = vld [vmem:[%s15 + $0x2c] sm:$0xff]
    %v930 = vld [vmem:[%s15 + $0x34] sm:$0xf]
    %v931 = vld [vmem:[%s15 + $0x38] sm:$0xff]
    %v932 = vld [vmem:[%s15 + $0x40] sm:$0xff]
    %v933 = vld [vmem:[%s15 + $0x48] sm:$0xff]
    %v934 = vld [vmem:[%s15 + $0x50] sm:$0xf]
    %v935 = vld [vmem:[%s15 + $0x54] sm:$0xff]
    %v936 = vld [vmem:[%s15 + $0x5c] sm:$0xff]
    %v937 = vld [vmem:[%s15 + $0x64] sm:$0xff]
    %v938 = vld [vmem:[%s15 + $0x6c] sm:$0xf]
    %v939 = vld [vmem:[%s15 + $0x70] sm:$0xff]
    %v940 = vld [vmem:[%s15 + $0x78] sm:$0xff]
    %v941 = vld [vmem:[%s15 + $0x80] sm:$0xff]
    %v942 = vld [vmem:[%s15 + $0x88] sm:$0xf]
    %v943 = vld [vmem:[%s15 + $0x8c] sm:$0xff]
    %v944 = vld [vmem:[%s15 + $0x94] sm:$0xff]
    %v945 = vld [vmem:[%s15 + $0x9c] sm:$0xff]
    %v946 = vld [vmem:[%s15 + $0xa4] sm:$0xf]
    %v947 = vld [vmem:[%s15 + $0xa8] sm:$0xff]
    %v948 = vld [vmem:[%s15 + $0xb0] sm:$0xff]
    %v949 = vld [vmem:[%s15 + $0xb8] sm:$0xff]
    %v950 = vld [vmem:[%s15 + $0xc0] sm:$0xf]
    %v951 = vld [vmem:[%s15 + $0xc4] sm:$0xff]
    %v952 = vld [vmem:[%s15 + $0xcc] sm:$0xff]
    %v953 = vld [vmem:[%s15 + $0xd4] sm:$0xff]
    %v954 = vld [vmem:[%s15 + $0xdc] sm:$0xf]
    %v955 = vld [vmem:[%s15 + $0xe0] sm:$0xff]
    %v956 = vld [vmem:[%s15 + $0xe8] sm:$0xff]
    %v957 = vld [vmem:[%s15 + $0xf0] sm:$0xff]
    %v958 = vld [vmem:[%s15 + $0xf8] sm:$0xf]
    %v959 = vld [vmem:[%s15 + $0xfc] sm:$0xff]
    %v960 = vld [vmem:[%s15 + $0x104] sm:$0xff]
    %v961 = vld [vmem:[%s15 + $0x10c] sm:$0xff]
    %v962 = vld [vmem:[%s15 + $0x114] sm:$0xf]
    %v963 = vld [vmem:[%s15 + $0x118] sm:$0xff]
    %v964 = vld [vmem:[%s15 + $0x120] sm:$0xff]
    %v965 = vld [vmem:[%s15 + $0x128] sm:$0xff]
    %v966 = vld [vmem:[%s15 + $0x130] sm:$0xf]
    %v967 = vld [vmem:[%s15 + $0x134] sm:$0xff]
    %v968 = vld [vmem:[%s15 + $0x13c] sm:$0xff]
    %v969 = vld [vmem:[%s15 + $0x144] sm:$0xff]
    %v970 = vld [vmem:[%s15 + $0x14c] sm:$0xf]
    %v971 = vld [vmem:[%s15 + $0x150] sm:$0xff]
    %v972 = vld [vmem:[%s15 + $0x158] sm:$0xff]
    %v973 = vld [vmem:[%s15 + $0x160] sm:$0xff]
    %v974 = vld [vmem:[%s15 + $0x168] sm:$0xf]
    %v975 = vld [vmem:[%s15 + $0x16c] sm:$0xff]
    %v976 = vld [vmem:[%s15 + $0x174] sm:$0xff]
    %v977 = vld [vmem:[%s15 + $0x17c] sm:$0xff]
    %v978 = vld [vmem:[%s15 + $0x184] sm:$0xf]
    %v979 = vld [vmem:[%s15 + $0x188] sm:$0xff]
    %v980 = vld [vmem:[%s15 + $0x190] sm:$0xff]
    %v981 = vld [vmem:[%s15 + $0x198] sm:$0xff]
    %v982 = vld [vmem:[%s15 + $0x1a0] sm:$0xf]
    %v983 = vld [vmem:[%s15 + $0x1a4] sm:$0xff]
    %v984 = vld [vmem:[%s15 + $0x1ac] sm:$0xff]
    %v985 = vld [vmem:[%s15 + $0x1b4] sm:$0xff]
    %v986 = vld [vmem:[%s15 + $0x1bc] sm:$0xf]
    %v987 = vld [vmem:[%s16] sm:$0x7f]
    %v989 = vperm.slane %v987, 0
    %v990 = vperm.slane %v987, 1
    %v991 = vperm.slane %v987, 2
    %v992 = vperm.slane %v987, 3
    %v993 = vperm.slane %v987, 4
    %v994 = vperm.slane %v987, 5
    %v995 = vperm.slane %v987, 6
    %v1067 = vunpack.c.l.b16 %v923
    %v1068 = vunpack.c.h.b16 %v923
    %v1069 = vunpack.c.l.b16 %v924
    %v1070 = vunpack.c.h.b16 %v924
    %v1071 = vunpack.c.l.b16 %v925
    %v1072 = vunpack.c.h.b16 %v925
    %v1073 = vunpack.c.l.b16 %v926
    %v1074 = vunpack.c.l.b16 %v927
    %v1075 = vunpack.c.h.b16 %v927
    %v1076 = vunpack.c.l.b16 %v928
    %v1077 = vunpack.c.h.b16 %v928
    %v1078 = vunpack.c.l.b16 %v929
    %v1079 = vunpack.c.h.b16 %v929
    %v1080 = vunpack.c.l.b16 %v930
    %v1081 = vunpack.c.l.b16 %v931
    %v1082 = vunpack.c.h.b16 %v931
    %v1083 = vunpack.c.l.b16 %v932
    %v1084 = vunpack.c.h.b16 %v932
    %v1085 = vunpack.c.l.b16 %v933
    %v1086 = vunpack.c.h.b16 %v933
    %v1087 = vunpack.c.l.b16 %v934
    %v1088 = vunpack.c.l.b16 %v935
    %v1089 = vunpack.c.h.b16 %v935
    %v1090 = vunpack.c.l.b16 %v936
    %v1091 = vunpack.c.h.b16 %v936
    %v1092 = vunpack.c.l.b16 %v937
    %v1093 = vunpack.c.h.b16 %v937
    %v1094 = vunpack.c.l.b16 %v938
    %v1095 = vunpack.c.l.b16 %v939
    %v1096 = vunpack.c.h.b16 %v939
    %v1097 = vunpack.c.l.b16 %v940
    %v1098 = vunpack.c.h.b16 %v940
    %v1099 = vunpack.c.l.b16 %v941
    %v1100 = vunpack.c.h.b16 %v941
    %v1101 = vunpack.c.l.b16 %v942
    %v1102 = vunpack.c.l.b16 %v943
    %v1103 = vunpack.c.h.b16 %v943
    %v1104 = vunpack.c.l.b16 %v944
    %v1105 = vunpack.c.h.b16 %v944
    %v1106 = vunpack.c.l.b16 %v945
    %v1107 = vunpack.c.h.b16 %v945
    %v1108 = vunpack.c.l.b16 %v946
    %v1109 = vunpack.c.l.b16 %v947
    %v1110 = vunpack.c.h.b16 %v947
    %v1111 = vunpack.c.l.b16 %v948
    %v1112 = vunpack.c.h.b16 %v948
    %v1113 = vunpack.c.l.b16 %v949
    %v1114 = vunpack.c.h.b16 %v949
    %v1115 = vunpack.c.l.b16 %v950
    %v1116 = vunpack.c.l.b16 %v951
    %v1117 = vunpack.c.h.b16 %v951
    %v1118 = vunpack.c.l.b16 %v952
    %v1119 = vunpack.c.h.b16 %v952
    %v1120 = vunpack.c.l.b16 %v953
    %v1121 = vunpack.c.h.b16 %v953
    %v1122 = vunpack.c.l.b16 %v954
    %v1123 = vunpack.c.l.b16 %v955
    %v1124 = vunpack.c.h.b16 %v955
    %v1125 = vunpack.c.l.b16 %v956
    %v1126 = vunpack.c.h.b16 %v956
    %v1127 = vunpack.c.l.b16 %v957
    %v1128 = vunpack.c.h.b16 %v957
    %v1129 = vunpack.c.l.b16 %v958
    %v1130 = vunpack.c.l.b16 %v959
    %v1131 = vunpack.c.h.b16 %v959
    %v1132 = vunpack.c.l.b16 %v960
    %v1133 = vunpack.c.h.b16 %v960
    %v1134 = vunpack.c.l.b16 %v961
    %v1135 = vunpack.c.h.b16 %v961
    %v1136 = vunpack.c.l.b16 %v962
    %v1137 = vunpack.c.l.b16 %v963
    %v1138 = vunpack.c.h.b16 %v963
    %v1139 = vunpack.c.l.b16 %v964
    %v1140 = vunpack.c.h.b16 %v964
    %v1141 = vunpack.c.l.b16 %v965
    %v1142 = vunpack.c.h.b16 %v965
    %v1143 = vunpack.c.l.b16 %v966
    %v1144 = vunpack.c.l.b16 %v967
    %v1145 = vunpack.c.h.b16 %v967
    %v1146 = vunpack.c.l.b16 %v968
    %v1147 = vunpack.c.h.b16 %v968
    %v1148 = vunpack.c.l.b16 %v969
    %v1149 = vunpack.c.h.b16 %v969
    %v1150 = vunpack.c.l.b16 %v970
    %v1151 = vunpack.c.l.b16 %v971
    %v1152 = vunpack.c.h.b16 %v971
    %v1153 = vunpack.c.l.b16 %v972
    %v1154 = vunpack.c.h.b16 %v972
    %v1155 = vunpack.c.l.b16 %v973
    %v1156 = vunpack.c.h.b16 %v973
    %v1157 = vunpack.c.l.b16 %v974
    %v1158 = vunpack.c.l.b16 %v975
    %v1159 = vunpack.c.h.b16 %v975
    %v1160 = vunpack.c.l.b16 %v976
    %v1161 = vunpack.c.h.b16 %v976
    %v1162 = vunpack.c.l.b16 %v977
    %v1163 = vunpack.c.h.b16 %v977
    %v1164 = vunpack.c.l.b16 %v978
    %v1165 = vunpack.c.l.b16 %v979
    %v1166 = vunpack.c.h.b16 %v979
    %v1167 = vunpack.c.l.b16 %v980
    %v1168 = vunpack.c.h.b16 %v980
    %v1169 = vunpack.c.l.b16 %v981
    %v1170 = vunpack.c.h.b16 %v981
    %v1171 = vunpack.c.l.b16 %v982
    %v1172 = vunpack.c.l.b16 %v983
    %v1173 = vunpack.c.h.b16 %v983
    %v1174 = vunpack.c.l.b16 %v984
    %v1175 = vunpack.c.h.b16 %v984
    %v1176 = vunpack.c.l.b16 %v985
    %v1177 = vunpack.c.h.b16 %v985
    %v1178 = vunpack.c.l.b16 %v986
    %v1179 = vpack.c.b16 %v1074, %v1067
    %v1180 = vpack.c.b16 %v1075, %v1068
    %v1181 = vpack.c.b16 %v1076, %v1069
    %v1182 = vpack.c.b16 %v1077, %v1070
    %v1183 = vpack.c.b16 %v1078, %v1071
    %v1184 = vpack.c.b16 %v1079, %v1072
    %v1185 = vpack.c.b16 %v1080, %v1073
    %v1186 = vpack.c.b16 %v1088, %v1081
    %v1187 = vpack.c.b16 %v1089, %v1082
    %v1188 = vpack.c.b16 %v1090, %v1083
    %v1189 = vpack.c.b16 %v1091, %v1084
    %v1190 = vpack.c.b16 %v1092, %v1085
    %v1191 = vpack.c.b16 %v1093, %v1086
    %v1192 = vpack.c.b16 %v1094, %v1087
    %v1193 = vpack.c.b16 %v1102, %v1095
    %v1194 = vpack.c.b16 %v1103, %v1096
    %v1195 = vpack.c.b16 %v1104, %v1097
    %v1196 = vpack.c.b16 %v1105, %v1098
    %v1197 = vpack.c.b16 %v1106, %v1099
    %v1198 = vpack.c.b16 %v1107, %v1100
    %v1199 = vpack.c.b16 %v1108, %v1101
    %v1200 = vpack.c.b16 %v1116, %v1109
    %v1201 = vpack.c.b16 %v1117, %v1110
    %v1202 = vpack.c.b16 %v1118, %v1111
    %v1203 = vpack.c.b16 %v1119, %v1112
    %v1204 = vpack.c.b16 %v1120, %v1113
    %v1205 = vpack.c.b16 %v1121, %v1114
    %v1206 = vpack.c.b16 %v1122, %v1115
    %v1207 = vpack.c.b16 %v1130, %v1123
    %v1208 = vpack.c.b16 %v1131, %v1124
    %v1209 = vpack.c.b16 %v1132, %v1125
    %v1210 = vpack.c.b16 %v1133, %v1126
    %v1211 = vpack.c.b16 %v1134, %v1127
    %v1212 = vpack.c.b16 %v1135, %v1128
    %v1213 = vpack.c.b16 %v1136, %v1129
    %v1214 = vpack.c.b16 %v1144, %v1137
    %v1215 = vpack.c.b16 %v1145, %v1138
    %v1216 = vpack.c.b16 %v1146, %v1139
    %v1217 = vpack.c.b16 %v1147, %v1140
    %v1218 = vpack.c.b16 %v1148, %v1141
    %v1219 = vpack.c.b16 %v1149, %v1142
    %v1220 = vpack.c.b16 %v1150, %v1143
    %v1221 = vpack.c.b16 %v1158, %v1151
    %v1222 = vpack.c.b16 %v1159, %v1152
    %v1223 = vpack.c.b16 %v1160, %v1153
    %v1224 = vpack.c.b16 %v1161, %v1154
    %v1225 = vpack.c.b16 %v1162, %v1155
    %v1226 = vpack.c.b16 %v1163, %v1156
    %v1227 = vpack.c.b16 %v1164, %v1157
    %v1228 = vpack.c.b16 %v1172, %v1165
    %v1229 = vpack.c.b16 %v1173, %v1166
    %v1230 = vpack.c.b16 %v1174, %v1167
    %v1231 = vpack.c.b16 %v1175, %v1168
    %v1232 = vpack.c.b16 %v1176, %v1169
    %v1233 = vpack.c.b16 %v1177, %v1170
    %v1234 = vpack.c.b16 %v1178, %v1171
    %1291 = vmatpush.bf16.msra.mxu0 %v1228
    %1292 = vmatpush.bf16.msra.mxu0 %v1221
    %1293 = vmatpush.bf16.msra.mxu0 %v1214
    %1294 = vmatpush.bf16.msra.mxu0 %v1207
    %1295 = vmatpush.bf16.msra.mxu0 %v1200
    %1296 = vmatpush.bf16.msra.mxu0 %v1193
    %1297 = vmatpush.bf16.msra.mxu0 %v1186
    %1298 = vmatpush.bf16.msra.mxu0 %v1179
    %1299 = vmatmul.bf16.gmra.mxu0 %v922
    %v1300 = vpop.f32.mrf.mxu0
    %v1301 = vadd.f32 %v989, %v1300
    %v1302 = vpop.f32.mrf.mxu0
    %v1303 = vadd.f32 %v989, %v1302
    %1304 = vdwg.mxu0
    %1305 = vmatpush.bf16.msra.mxu0 %v1229
    %1306 = vmatpush.bf16.msra.mxu0 %v1222
    %1307 = vmatpush.bf16.msra.mxu0 %v1215
    %1308 = vmatpush.bf16.msra.mxu0 %v1208
    %1309 = vmatpush.bf16.msra.mxu0 %v1201
    %1310 = vmatpush.bf16.msra.mxu0 %v1194
    %1311 = vmatpush.bf16.msra.mxu0 %v1187
    %1312 = vmatpush.bf16.msra.mxu0 %v1180
    %1313 = vmatmul.bf16.gmra.mxu0 %v922
    %v1314 = vpop.f32.mrf.mxu0
    %v1315 = vadd.f32 %v990, %v1314
    %v1316 = vpop.f32.mrf.mxu0
    %v1317 = vadd.f32 %v990, %v1316
    %1318 = vdwg.mxu0
    %1319 = vmatpush.bf16.msra.mxu0 %v1230
    %1320 = vmatpush.bf16.msra.mxu0 %v1223
    %1321 = vmatpush.bf16.msra.mxu0 %v1216
    %1322 = vmatpush.bf16.msra.mxu0 %v1209
    %1323 = vmatpush.bf16.msra.mxu0 %v1202
    %1324 = vmatpush.bf16.msra.mxu0 %v1195
    %1325 = vmatpush.bf16.msra.mxu0 %v1188
    %1326 = vmatpush.bf16.msra.mxu0 %v1181
    %1327 = vmatmul.bf16.gmra.mxu0 %v922
    %v1328 = vpop.f32.mrf.mxu0
    %v1329 = vadd.f32 %v991, %v1328
    %v1330 = vpop.f32.mrf.mxu0
    %v1331 = vadd.f32 %v991, %v1330
    %1332 = vdwg.mxu0
    %1333 = vmatpush.bf16.msra.mxu0 %v1231
    %1334 = vmatpush.bf16.msra.mxu0 %v1224
    %1335 = vmatpush.bf16.msra.mxu0 %v1217
    %1336 = vmatpush.bf16.msra.mxu0 %v1210
    %1337 = vmatpush.bf16.msra.mxu0 %v1203
    %1338 = vmatpush.bf16.msra.mxu0 %v1196
    %1339 = vmatpush.bf16.msra.mxu0 %v1189
    %1340 = vmatpush.bf16.msra.mxu0 %v1182
    %1341 = vmatmul.bf16.gmra.mxu0 %v922
    %v1342 = vpop.f32.mrf.mxu0
    %v1343 = vadd.f32 %v992, %v1342
    %v1344 = vpop.f32.mrf.mxu0
    %v1345 = vadd.f32 %v992, %v1344
    %1346 = vdwg.mxu0
    %1347 = vmatpush.bf16.msra.mxu0 %v1232
    %1348 = vmatpush.bf16.msra.mxu0 %v1225
    %1349 = vmatpush.bf16.msra.mxu0 %v1218
    %1350 = vmatpush.bf16.msra.mxu0 %v1211
    %1351 = vmatpush.bf16.msra.mxu0 %v1204
    %1352 = vmatpush.bf16.msra.mxu0 %v1197
    %1353 = vmatpush.bf16.msra.mxu0 %v1190
    %1354 = vmatpush.bf16.msra.mxu0 %v1183
    %1355 = vmatmul.bf16.gmra.mxu0 %v922
    %v1356 = vpop.f32.mrf.mxu0
    %v1357 = vadd.f32 %v993, %v1356
    %v1358 = vpop.f32.mrf.mxu0
    %v1359 = vadd.f32 %v993, %v1358
    %1360 = vdwg.mxu0
    %1361 = vmatpush.bf16.msra.mxu0 %v1233
    %1362 = vmatpush.bf16.msra.mxu0 %v1226
    %1363 = vmatpush.bf16.msra.mxu0 %v1219
    %1364 = vmatpush.bf16.msra.mxu0 %v1212
    %1365 = vmatpush.bf16.msra.mxu0 %v1205
    %1366 = vmatpush.bf16.msra.mxu0 %v1198
    %1367 = vmatpush.bf16.msra.mxu0 %v1191
    %1368 = vmatpush.bf16.msra.mxu0 %v1184
    %1369 = vmatmul.bf16.gmra.mxu0 %v922
    %v1370 = vpop.f32.mrf.mxu0
    %v1371 = vadd.f32 %v994, %v1370
    %v1372 = vpop.f32.mrf.mxu0
    %v1373 = vadd.f32 %v994, %v1372
    %1374 = vdwg.mxu0
    %1375 = vmatpush.bf16.msra.mxu0 %v1234
    %1376 = vmatpush.bf16.msra.mxu0 %v1227
    %1377 = vmatpush.bf16.msra.mxu0 %v1220
    %1378 = vmatpush.bf16.msra.mxu0 %v1213
    %1379 = vmatpush.bf16.msra.mxu0 %v1206
    %1380 = vmatpush.bf16.msra.mxu0 %v1199
    %1381 = vmatpush.bf16.msra.mxu0 %v1192
    %1382 = vmatpush.bf16.msra.mxu0 %v1185
    %1383 = vmatmul.bf16.gmra.mxu0 %v922
    %v1384 = vpop.f32.mrf.mxu0
    %v1385 = vadd.f32 %v995, %v1384
    %v1386 = vpop.f32.mrf.mxu0
    %v1387 = vadd.f32 %v995, %v1386
    %1388 = vdwg.mxu0
    %v1389 = vpack.c.bf16 %v1315, %v1301
    %v1390 = vpack.c.bf16 %v1343, %v1329
    %v1391 = vpack.c.bf16 %v1371, %v1357
    %v1392 = vpack.c.bf16 %v1385, %v1385
    %v1393 = vpack.c.bf16 %v1317, %v1303
    %v1394 = vpack.c.bf16 %v1345, %v1331
    %v1395 = vpack.c.bf16 %v1373, %v1359
    %v1396 = vpack.c.bf16 %v1387, %v1387
    %v1397 = vunpack.c.l.bf16 %v1389
    %v1398 = vunpack.c.h.bf16 %v1389
    %v1399 = vunpack.c.l.bf16 %v1390
    %v1400 = vunpack.c.h.bf16 %v1390
    %v1401 = vunpack.c.l.bf16 %v1391
    %v1402 = vunpack.c.h.bf16 %v1391
    %v1403 = vunpack.c.l.bf16 %v1392
    %v1404 = vunpack.c.l.bf16 %v1393
    %v1405 = vunpack.c.h.bf16 %v1393
    %v1406 = vunpack.c.l.bf16 %v1394
    %v1407 = vunpack.c.h.bf16 %v1394
    %v1408 = vunpack.c.l.bf16 %v1395
    %v1409 = vunpack.c.h.bf16 %v1395
    %v1410 = vunpack.c.l.bf16 %v1396
    %v1411 = vmul.f32 %v1397, 0.5
    %v1412 = vmul.f32 %v1398, 0.5
    %v1413 = vmul.f32 %v1399, 0.5
    %v1414 = vmul.f32 %v1400, 0.5
    %v1415 = vmul.f32 %v1401, 0.5
    %v1416 = vmul.f32 %v1402, 0.5
    %v1417 = vmul.f32 %v1403, 0.5
    %v1418 = vmul.f32 %v1404, 0.5
    %v1419 = vmul.f32 %v1405, 0.5
    %v1420 = vmul.f32 %v1406, 0.5
    %v1421 = vmul.f32 %v1407, 0.5
    %v1422 = vmul.f32 %v1408, 0.5
    %v1423 = vmul.f32 %v1409, 0.5
    %v1424 = vmul.f32 %v1410, 0.5
    %v1425 = vpack.c.bf16 %v1412, %v1411
    %v1426 = vpack.c.bf16 %v1414, %v1413
    %v1427 = vpack.c.bf16 %v1416, %v1415
    %v1428 = vpack.c.bf16 %v1417, %v1417
    %v1429 = vpack.c.bf16 %v1419, %v1418
    %v1430 = vpack.c.bf16 %v1421, %v1420
    %v1431 = vpack.c.bf16 %v1423, %v1422
    %v1432 = vpack.c.bf16 %v1424, %v1424
    %v1433 = vunpack.c.l.bf16 %v1425
    %v1434 = vunpack.c.h.bf16 %v1425
    %v1435 = vunpack.c.l.bf16 %v1426
    %v1436 = vunpack.c.h.bf16 %v1426
    %v1437 = vunpack.c.l.bf16 %v1427
    %v1438 = vunpack.c.h.bf16 %v1427
    %v1439 = vunpack.c.l.bf16 %v1428
    %v1440 = vunpack.c.l.bf16 %v1429
    %v1441 = vunpack.c.h.bf16 %v1429
    %v1442 = vunpack.c.l.bf16 %v1430
    %v1443 = vunpack.c.h.bf16 %v1430
    %v1444 = vunpack.c.l.bf16 %v1431
    %v1445 = vunpack.c.h.bf16 %v1431
    %v1446 = vunpack.c.l.bf16 %v1432
    %v1447 = vtanh.pop %v1433
    %v1448 = vtanh.pop %v1434
    %v1449 = vtanh.pop %v1435
    %v1450 = vtanh.pop %v1436
    %v1451 = vtanh.pop %v1437
    %v1452 = vtanh.pop %v1438
    %v1453 = vtanh.pop %v1439
    %v1454 = vtanh.pop %v1440
    %v1455 = vtanh.pop %v1441
    %v1456 = vtanh.pop %v1442
    %v1457 = vtanh.pop %v1443
    %v1458 = vtanh.pop %v1444
    %v1459 = vtanh.pop %v1445
    %v1460 = vtanh.pop %v1446
    %v1461 = vpack.c.bf16 %v1448, %v1447
    %v1462 = vpack.c.bf16 %v1450, %v1449
    %v1463 = vpack.c.bf16 %v1452, %v1451
    %v1464 = vpack.c.bf16 %v1453, %v1453
    %v1465 = vpack.c.bf16 %v1455, %v1454
    %v1466 = vpack.c.bf16 %v1457, %v1456
    %v1467 = vpack.c.bf16 %v1459, %v1458
    %v1468 = vpack.c.bf16 %v1460, %v1460
    %v1469 = vunpack.c.l.bf16 %v1461
    %v1470 = vunpack.c.h.bf16 %v1461
    %v1471 = vunpack.c.l.bf16 %v1462
    %v1472 = vunpack.c.h.bf16 %v1462
    %v1473 = vunpack.c.l.bf16 %v1463
    %v1474 = vunpack.c.h.bf16 %v1463
    %v1475 = vunpack.c.l.bf16 %v1464
    %v1476 = vunpack.c.l.bf16 %v1465
    %v1477 = vunpack.c.h.bf16 %v1465
    %v1478 = vunpack.c.l.bf16 %v1466
    %v1479 = vunpack.c.h.bf16 %v1466
    %v1480 = vunpack.c.l.bf16 %v1467
    %v1481 = vunpack.c.h.bf16 %v1467
    %v1482 = vunpack.c.l.bf16 %v1468
    %v1483 = vmul.f32 %v1469, 0.5
    %v1484 = vmul.f32 %v1470, 0.5
    %v1485 = vmul.f32 %v1471, 0.5
    %v1486 = vmul.f32 %v1472, 0.5
    %v1487 = vmul.f32 %v1473, 0.5
    %v1488 = vmul.f32 %v1474, 0.5
    %v1489 = vmul.f32 %v1475, 0.5
    %v1490 = vmul.f32 %v1476, 0.5
    %v1491 = vmul.f32 %v1477, 0.5
    %v1492 = vmul.f32 %v1478, 0.5
    %v1493 = vmul.f32 %v1479, 0.5
    %v1494 = vmul.f32 %v1480, 0.5
    %v1495 = vmul.f32 %v1481, 0.5
    %v1496 = vmul.f32 %v1482, 0.5
    %v1497 = vpack.c.bf16 %v1484, %v1483
    %v1498 = vpack.c.bf16 %v1486, %v1485
    %v1499 = vpack.c.bf16 %v1488, %v1487
    %v1500 = vpack.c.bf16 %v1489, %v1489
    %v1501 = vpack.c.bf16 %v1491, %v1490
    %v1502 = vpack.c.bf16 %v1493, %v1492
    %v1503 = vpack.c.bf16 %v1495, %v1494
    %v1504 = vpack.c.bf16 %v1496, %v1496
    %v1505 = vunpack.c.l.bf16 %v1497
    %v1506 = vunpack.c.h.bf16 %v1497
    %v1507 = vunpack.c.l.bf16 %v1498
    %v1508 = vunpack.c.h.bf16 %v1498
    %v1509 = vunpack.c.l.bf16 %v1499
    %v1510 = vunpack.c.h.bf16 %v1499
    %v1511 = vunpack.c.l.bf16 %v1500
    %v1512 = vunpack.c.l.bf16 %v1501
    %v1513 = vunpack.c.h.bf16 %v1501
    %v1514 = vunpack.c.l.bf16 %v1502
    %v1515 = vunpack.c.h.bf16 %v1502
    %v1516 = vunpack.c.l.bf16 %v1503
    %v1517 = vunpack.c.h.bf16 %v1503
    %v1518 = vunpack.c.l.bf16 %v1504
    %v1519 = vadd.f32 %v1505, 0.5
    %v1520 = vadd.f32 %v1506, 0.5
    %v1521 = vadd.f32 %v1507, 0.5
    %v1522 = vadd.f32 %v1508, 0.5
    %v1523 = vadd.f32 %v1509, 0.5
    %v1524 = vadd.f32 %v1510, 0.5
    %v1525 = vadd.f32 %v1511, 0.5
    %v1526 = vadd.f32 %v1512, 0.5
    %v1527 = vadd.f32 %v1513, 0.5
    %v1528 = vadd.f32 %v1514, 0.5
    %v1529 = vadd.f32 %v1515, 0.5
    %v1530 = vadd.f32 %v1516, 0.5
    %v1531 = vadd.f32 %v1517, 0.5
    %v1532 = vadd.f32 %v1518, 0.5
    %v1533 = vpack.c.bf16 %v1520, %v1519
    %v1534 = vpack.c.bf16 %v1522, %v1521
    %v1535 = vpack.c.bf16 %v1524, %v1523
    %v1536 = vpack.c.bf16 %v1525, %v1525
    %v1537 = vpack.c.bf16 %v1527, %v1526
    %v1538 = vpack.c.bf16 %v1529, %v1528
    %v1539 = vpack.c.bf16 %v1531, %v1530
    %v1540 = vpack.c.bf16 %v1532, %v1532
    %1541 = vst [vmem:[#allocation2] sm:$0xff] %v1533
    %1542 = vst [vmem:[#allocation2 + $0x8] sm:$0xff] %v1534
    %1543 = vst [vmem:[#allocation2 + $0x10] sm:$0xff] %v1535
    %vm1544 = vcmask 125952
    %1545 = vst.msk [vmem:[#allocation2 + $0x18] sm:$0xf] %vm1544, %v1536
    %1546 = vst [vmem:[#allocation2 + $0x1c] sm:$0xff] %v1537
    %1547 = vst [vmem:[#allocation2 + $0x24] sm:$0xff] %v1538
    %1548 = vst [vmem:[#allocation2 + $0x2c] sm:$0xff] %v1539
    %1549 = vst.msk [vmem:[#allocation2 + $0x34] sm:$0xf] %vm1544, %v1540
    // Predicated region
    $region70: #{autoencoder_forward.1} parent=1 // pred_check
      _
    $region71: #{autoencoder_forward.1} parent=1 // pred_check_branch
      %1551 = sbr.rel (0) target = $region73
    $region72: #{autoencoder_forward.1} parent=1 // pred_region
      _
    $region73: #{autoencoder_forward.1} parent=1 // pred_fallthru
      _
    // Predicated region
    $region74: #{autoencoder_forward.1} parent=1 // pred_check
      _
    $region75: #{autoencoder_forward.1} parent=1 // pred_check_branch
      %1553 = sbr.rel (0) target = $region77
    $region76: #{autoencoder_forward.1} parent=1 // pred_region
      %1555 = vsyncadd [#allocation3], 0
      %s1556 = sshll.u32 [#allocation2], 4
      %s1557 = int_to_ptr.vmem [resolvable:$true] %s1556
      %s1558 = sshll.u32 %s18, 4
      %s1559 = int_to_ptr.hbm [resolvable:$true] %s1558
      %1564 = dma.vmem_to_hbm [thread:$0]  %s1557, 896, %s1559, [#allocation3], 448, 448, 28
    $region77: #{autoencoder_forward.1} parent=1 // pred_fallthru
      _
    // Predicated region
    $region78: #{autoencoder_forward.1} parent=1 // pred_check
      _
    $region79: #{autoencoder_forward.1} parent=1 // pred_check_branch
      %1566 = sbr.rel (0) target = $region81
    $region80: #{autoencoder_forward.1} parent=1 // pred_region
      _
    $region81: #{autoencoder_forward.1} parent=1 // pred_fallthru
      _
    // Predicated region
    $region82: #{autoencoder_forward.1} parent=1 // pred_check
      _
    $region83: #{autoencoder_forward.1} parent=1 // pred_check_branch
      %1568 = sbr.rel (0) target = $region85
    $region84: #{autoencoder_forward.1} parent=1 // pred_region
      %1570 = dma.done [#allocation3], 896
    $region85: #{autoencoder_forward.1} parent=1 // pred_fallthru
      _
    %1571 = vsyncpa [#allocation3], 1

</llo_original>
